<compile_context>
chip_gen: v6e
topology: v6e:2x2x1
jax: 0.10.0
libtpu: 0.0.40
codegen_flags: <defaults>
</compile_context>

<pallas_src>
import functools

import jax
import jax.numpy as jnp
from jax import lax
from jax.experimental import pallas as pl
from jax.experimental.pallas import tpu as pltpu


_VMEM_LIMIT_BYTES = 32 * 1024 * 1024   # safe under v7x's 64 MiB physical VMEM


# ----------------------------------------------------------------------------- helpers
def _round_up(n, m):
    return (n + m - 1) // m * m


def _largest_divisor(n, candidates):
    for c in candidates:
        if n % c == 0:
            return c
    return n


def _pad2(a, rows, cols):
    out = jnp.zeros((rows, cols), a.dtype)
    return out.at[: a.shape[0], : a.shape[1]].set(a)


def _pad1(a, n):
    out = jnp.zeros((n,), a.dtype)
    return out.at[: a.shape[0]].set(a)


# --------------------------------------------------------------- phase 1 / 3: projection
def _proj_kernel(x_ref, w_ref, b_ref, o_ref, *, out_time_major):
    # x_ref: (Tt, B, K)   w_ref: (K, Nt)   b_ref: (1, Nt)
    tt, b, k = x_ref.shape
    nt = w_ref.shape[1]
    y = jnp.dot(x_ref[...].reshape(tt * b, k), w_ref[...],
                preferred_element_type=jnp.float32) + b_ref[...]
    y = y.reshape(tt, b, nt)
    if not out_time_major:
        y = jnp.transpose(y, (1, 0, 2))        # write batch-first (B, Tt, Nt)
    o_ref[...] = y.astype(o_ref.dtype)


def _time_parallel_proj(x, w, b, *, out_time_major, out_dtype, t_chunk, n_tile):
    """y[t, b, :] = x[t, b, :] @ w + b  as a fully parallel tiled matmul."""
    t_pad, b_pad, k = x.shape
    n = w.shape[1]
    grid = (t_pad // t_chunk, n // n_tile)

    if out_time_major:
        out_shape = jax.ShapeDtypeStruct((t_pad, b_pad, n), out_dtype)
        out_spec = pl.BlockSpec((t_chunk, b_pad, n_tile), lambda t, j: (t, 0, j))
    else:
        out_shape = jax.ShapeDtypeStruct((b_pad, t_pad, n), out_dtype)
        out_spec = pl.BlockSpec((b_pad, t_chunk, n_tile), lambda t, j: (0, t, j))

    return pl.pallas_call(
        functools.partial(_proj_kernel, out_time_major=out_time_major),
        out_shape=out_shape,
        grid_spec=pltpu.PrefetchScalarGridSpec(
            num_scalar_prefetch=0,
            grid=grid,
            in_specs=[
                pl.BlockSpec((t_chunk, b_pad, k), lambda t, j: (t, 0, 0)),
                pl.BlockSpec((k, n_tile), lambda t, j: (0, j)),
                pl.BlockSpec((1, n_tile), lambda t, j: (0, j)),
            ],
            out_specs=out_spec,
        ),
        compiler_params=pltpu.CompilerParams(
            dimension_semantics=("parallel", "parallel"),   # megacore on v7x
            vmem_limit_bytes=_VMEM_LIMIT_BYTES,
        ),
    )(x, w, b)


# ------------------------------------------------------------------- phase 2: recurrence
def _recurrence_kernel(xp_ref,       # (Tt, B, Hp)  precomputed x@Wih0 + b0  (f32)
                       whh0_ref,     # (Hp, Hp)
                       w1_ref,       # (2Hp, Hp)    stacked [Wih1 ; Whh1]
                       b1_ref,       # (1, Hp)      f32
                       h2_out_ref,   # (Tt, B, Hp)
                       h1_ref, h2_ref,              # VMEM scratch (B, Hp) f32
                       *, unroll):
    @pl.when(pl.program_id(0) == 0)
    def _init():
        h1_ref[...] = jnp.zeros_like(h1_ref)
        h2_ref[...] = jnp.zeros_like(h2_ref)

    t_chunk = xp_ref.shape[0]
    mxu_dtype = whh0_ref.dtype

    def step(t, carry):
        h1_prev, h2_prev = carry
        # layer 0: input projection already hoisted; only h@Whh0 stays serial
        pre1 = xp_ref[t] + jnp.dot(h1_prev.astype(mxu_dtype), whh0_ref[...],
                                   preferred_element_type=jnp.float32)
        h1 = jnp.tanh(pre1)
        # layer 1: single fused matmul  [h1, h2] @ [Wih1 ; Whh1]
        h12 = jnp.concatenate([h1, h2_prev], axis=-1).astype(mxu_dtype)
        pre2 = jnp.dot(h12, w1_ref[...],
                       preferred_element_type=jnp.float32) + b1_ref[...]
        h2 = jnp.tanh(pre2)
        h2_out_ref[t] = h2.astype(h2_out_ref.dtype)
        return (h1, h2)

    h1, h2 = lax.fori_loop(0, t_chunk, step, (h1_ref[...], h2_ref[...]),
                           unroll=unroll)
    h1_ref[...] = h1            # persist carry to the next T-chunk grid step
    h2_ref[...] = h2


def _rnn_recurrence(x_proj, whh0, w1, b1, *, t_chunk, out_dtype):
    t_pad, b_pad, h_pad = x_proj.shape
    unroll = True if t_chunk <= 16 else 8
    return pl.pallas_call(
        functools.partial(_recurrence_kernel, unroll=unroll),
        out_shape=jax.ShapeDtypeStruct((t_pad, b_pad, h_pad), out_dtype),
        grid_spec=pltpu.PrefetchScalarGridSpec(
            num_scalar_prefetch=0,
            grid=(t_pad // t_chunk,),
            in_specs=[
                pl.BlockSpec((t_chunk, b_pad, h_pad), lambda t: (t, 0, 0)),
                pl.BlockSpec(whh0.shape, lambda t: (0, 0)),   # weights stay resident
                pl.BlockSpec(w1.shape, lambda t: (0, 0)),
                pl.BlockSpec(b1.shape, lambda t: (0, 0)),
            ],
            out_specs=pl.BlockSpec((t_chunk, b_pad, h_pad), lambda t: (t, 0, 0)),
            scratch_shapes=[pltpu.VMEM((b_pad, h_pad), jnp.float32),
                            pltpu.VMEM((b_pad, h_pad), jnp.float32)],
        ),
        compiler_params=pltpu.CompilerParams(
            dimension_semantics=("arbitrary",),   # inherently sequential in time
            vmem_limit_bytes=_VMEM_LIMIT_BYTES,
        ),
    )(x_proj, whh0, w1, b1)


# ------------------------------------------------------------------------------ forward
def rnn_lm_forward(tokens, params, mxu_dtype=jnp.float32):
    """tokens: (B, T) int32 -> logits (B, T, V) float32.

    Matches PyTorch: Embedding -> nn.RNN(tanh, 2 layers, batch_first) -> Linear.
    mxu_dtype=jnp.bfloat16 feeds bf16 to the MXU (f32 accumulation) for v6e/v7x.
    """
    B, T = tokens.shape
    V, E = params["emb"].shape
    H = params["w_hh_l0"].shape[0]

    b_pad = _round_up(max(B, 8), 8)        # fill f32 sublanes
    t_pad = _round_up(T, 8)
    h_pad = _round_up(H, 128)              # lane / MXU aligned hidden
    v_pad = _round_up(V, 128)              # lane-dense logits stores
    t_chunk = _largest_divisor(t_pad, (64, 32, 16, 8))
    h_tile = _largest_divisor(h_pad, (512, 256, 128))
    v_tile = _largest_divisor(v_pad, (512, 256, 128))

    # Embedding gather + time-major layout (small glue over T*B*E).
    # TODO(synk): fold the gather into phase 1 via scalar-prefetched token ids +
    # pl.Element row gather to skip the (B,T,E)->(T,B,E) HBM round trip.
    tok_p = jnp.zeros((b_pad, t_pad), jnp.int32).at[:B, :T].set(tokens)
    x = jnp.take(params["emb"], tok_p, axis=0)               # (b_pad, t_pad, E)
    x_tm = jnp.transpose(x, (1, 0, 2)).astype(mxu_dtype)     # (t_pad, b_pad, E)

    # Zero-padded, pre-transposed weights (kernel right-multiplies: x @ W).
    wih0 = _pad2(params["w_ih_l0"].T, E, h_pad).astype(mxu_dtype)          # (E, Hp)
    whh0 = _pad2(params["w_hh_l0"].T, h_pad, h_pad).astype(mxu_dtype)      # (Hp, Hp)
    b0 = _pad1(params["b_ih_l0"] + params["b_hh_l0"], h_pad)[None, :]      # (1, Hp)
    wih1 = _pad2(params["w_ih_l1"].T, h_pad, h_pad)
    whh1 = _pad2(params["w_hh_l1"].T, h_pad, h_pad)
    w1 = jnp.concatenate([wih1, whh1], axis=0).astype(mxu_dtype)           # (2Hp, Hp)
    b1 = _pad1(params["b_ih_l1"] + params["b_hh_l1"], h_pad)[None, :]      # (1, Hp)
    wlm = _pad2(params["w_lm"].T, h_pad, v_pad).astype(mxu_dtype)          # (Hp, Vp)
    blm = _pad1(params["b_lm"], v_pad)[None, :]                            # (1, Vp)

    # Phase 1: layer-0 input projection for all timesteps (parallel tiled matmul).
    x_proj = _time_parallel_proj(x_tm, wih0, b0, out_time_major=True,
                                 out_dtype=jnp.float32,
                                 t_chunk=t_chunk, n_tile=h_tile)

    # Phase 2: sequential recurrence with hidden state carried in VMEM scratch.
    h2_seq = _rnn_recurrence(x_proj, whh0, w1, b1,
                             t_chunk=t_chunk, out_dtype=mxu_dtype)

    # Phase 3: lm_head as one large tiled matmul, written batch-first.
    logits_pad = _time_parallel_proj(h2_seq, wlm, blm, out_time_major=False,
                                     out_dtype=jnp.float32,
                                     t_chunk=t_chunk, n_tile=v_tile)

    return logits_pad[:B, :T, :V]                            # drop padding


# --------------------------------------------------------------------------- params/ref
def init_params(key, vocab_size, n_embd, n_hidden):
    ks = jax.random.split(key, 11)
    s = 1.0 / jnp.sqrt(n_hidden)
    u = lambda k, shape: jax.random.uniform(k, shape, jnp.float32, -s, s)
    return {
        "emb":      jax.random.normal(ks[0], (vocab_size, n_embd), jnp.float32),
        "w_ih_l0":  u(ks[1], (n_hidden, n_embd)),
        "w_hh_l0":  u(ks[2], (n_hidden, n_hidden)),
        "b_ih_l0":  u(ks[3], (n_hidden,)),
        "b_hh_l0":  u(ks[4], (n_hidden,)),
        "w_ih_l1":  u(ks[5], (n_hidden, n_hidden)),
        "w_hh_l1":  u(ks[6], (n_hidden, n_hidden)),
        "b_ih_l1":  u(ks[7], (n_hidden,)),
        "b_hh_l1":  u(ks[8], (n_hidden,)),
        "w_lm":     u(ks[9], (vocab_size, n_hidden)),
        "b_lm":     u(ks[10], (vocab_size,)),
    }


def reference_forward(tokens, params):
    """Pure-JAX reference matching PyTorch nn.RNN(tanh, 2 layers, batch_first)."""
    x = jnp.take(params["emb"], tokens, axis=0)          # (B, T, E)
    B, T, _ = x.shape
    H = params["w_hh_l0"].shape[0]

    def scan_step(carry, x_t):
        h1, h2 = carry
        h1 = jnp.tanh(x_t @ params["w_ih_l0"].T + params["b_ih_l0"]
                      + h1 @ params["w_hh_l0"].T + params["b_hh_l0"])
        h2 = jnp.tanh(h1 @ params["w_ih_l1"].T + params["b_ih_l1"]
                      + h2 @ params["w_hh_l1"].T + params["b_hh_l1"])
        return (h1, h2), h2

    h0 = (jnp.zeros((B, H), jnp.float32), jnp.zeros((B, H), jnp.float32))
    _, context = lax.scan(scan_step, h0, jnp.transpose(x, (1, 0, 2)))  # (T, B, H)
    context = jnp.transpose(context, (1, 0, 2))                        # (B, T, H)
    return context @ params["w_lm"].T + params["b_lm"]                 # (B, T, V)


# --------------------------------------------------------------------------------- main
if __name__ == "__main__":
    config = {"vocab_size": 27, "n_embd": 16, "n_hidden": 32}
    B, T = 2, 8

    key = jax.random.PRNGKey(0)
    k_params, k_tok = jax.random.split(key)
    params = init_params(k_params, config["vocab_size"], config["n_embd"],
                         config["n_hidden"])
    tokens = jax.random.randint(k_tok, (B, T), 0, config["vocab_size"],
                                dtype=jnp.int32)

    ref = jax.block_until_ready(reference_forward(tokens, params))

    # f32 path (gates correctness).
    fwd_f32 = jax.jit(functools.partial(rnn_lm_forward, mxu_dtype=jnp.float32))
    logits = jax.block_until_ready(fwd_f32(tokens, params))
    assert logits.shape == (B, T, config["vocab_size"])
    assert jnp.allclose(logits, ref, atol=5e-4, rtol=5e-4), "f32 mismatch vs reference"

    # bf16 MXU-input path (v6e/v7x recommendation; f32 accumulation) — loose sanity bound.
    fwd_bf16 = jax.jit(functools.partial(rnn_lm_forward, mxu_dtype=jnp.bfloat16))
    logits_bf16 = jax.block_until_ready(fwd_bf16(tokens, params))
    assert logits_bf16.shape == (B, T, config["vocab_size"])
    assert jnp.allclose(logits_bf16, ref, atol=0.5), "bf16 path diverged from reference"

    print("KERNEL_OK")
</pallas_src>

<mosaic_0001>
module attributes {stable_mosaic.version = 11 : i64} {
  func.func @_proj_kernel(%arg0: i32, %arg1: i32, %arg2: memref<8x8x16xf32, #tpu.memory_space<vmem>>, %arg3: memref<16x128xf32, #tpu.memory_space<vmem>>, %arg4: memref<1x128xf32, #tpu.memory_space<vmem>>, %arg5: memref<8x8x128xf32, #tpu.memory_space<vmem>>) attributes {dimension_semantics = [#tpu.dimension_semantics<parallel>, #tpu.dimension_semantics<parallel>], iteration_bounds = array<i64: 1, 1>, scalar_prefetch = 0 : i64, scratch_operands = 0 : i64, tpu.core_type = #tpu.core_type<tc>, window_params = [{transform_indices = @transform_0, window_bounds = array<i64: 8, 8, 16>}, {transform_indices = @transform_1, window_bounds = array<i64: 16, 128>}, {transform_indices = @transform_2, window_bounds = array<i64: 1, 128>}, {transform_indices = @transform_3, window_bounds = array<i64: 8, 8, 128>}]} {
    %c0 = arith.constant 0 : index
    %c0_0 = arith.constant 0 : index
    %c0_1 = arith.constant 0 : index
    %0 = vector.load %arg2[%c0, %c0_0, %c0_1] : memref<8x8x16xf32, #tpu.memory_space<vmem>>, vector<8x8x16xf32>
    %1 = vector.shape_cast %0 : vector<8x8x16xf32> to vector<64x16xf32>
    %c0_2 = arith.constant 0 : index
    %c0_3 = arith.constant 0 : index
    %2 = vector.load %arg3[%c0_2, %c0_3] : memref<16x128xf32, #tpu.memory_space<vmem>>, vector<16x128xf32>
    %cst = arith.constant dense<0.000000e+00> : vector<64x128xf32>
    %3 = tpu.matmul %1, %2, %cst {dimension_numbers = #tpu.dot_dimension_numbers<[1], [0], [0], [1], [0, 0, 1, 1], [], []>} : vector<64x16xf32>, vector<16x128xf32>, vector<64x128xf32> -> vector<64x128xf32>
    %c0_4 = arith.constant 0 : index
    %c0_5 = arith.constant 0 : index
    %4 = vector.load %arg4[%c0_4, %c0_5] : memref<1x128xf32, #tpu.memory_space<vmem>>, vector<1x128xf32>
    %5 = vector.broadcast %4 : vector<1x128xf32> to vector<64x128xf32>
    %6 = arith.addf %3, %5 : vector<64x128xf32>
    %7 = vector.shape_cast %6 : vector<64x128xf32> to vector<8x8x128xf32>
    %c0_6 = arith.constant 0 : index
    %c0_7 = arith.constant 0 : index
    %c0_8 = arith.constant 0 : index
    %8 = vector.load %arg5[%c0_6, %c0_7, %c0_8] : memref<8x8x128xf32, #tpu.memory_space<vmem>>, vector<8x8x128xf32>
    tpu.vector_store %arg5[%c0_6, %c0_7, %c0_8], %7 {strides = array<i32>} : memref<8x8x128xf32, #tpu.memory_space<vmem>>, vector<8x8x128xf32>,
    return
  }
  func.func @transform_0(%arg0: i32, %arg1: i32) -> (i32, i32, i32) {
    %c0_i32 = arith.constant 0 : i32
    %c0_i32_0 = arith.constant 0 : i32
    %c0_i32_1 = arith.constant 0 : i32
    return %arg0, %c0_i32, %c0_i32_0 : i32, i32, i32
  }
  func.func @transform_1(%arg0: i32, %arg1: i32) -> (i32, i32) {
    %c0_i32 = arith.constant 0 : i32
    %c0_i32_0 = arith.constant 0 : i32
    return %c0_i32, %arg1 : i32, i32
  }
  func.func @transform_2(%arg0: i32, %arg1: i32) -> (i32, i32) {
    %c0_i32 = arith.constant 0 : i32
    %c0_i32_0 = arith.constant 0 : i32
    return %c0_i32, %arg1 : i32, i32
  }
  func.func @transform_3(%arg0: i32, %arg1: i32) -> (i32, i32, i32) {
    %c0_i32 = arith.constant 0 : i32
    %c0_i32_0 = arith.constant 0 : i32
    return %arg0, %c0_i32, %arg1 : i32, i32, i32
  }
}

module attributes {stable_mosaic.version = 11 : i64} {
  func.func @_recurrence_kernel(%arg0: i32, %arg1: memref<8x8x128xf32, #tpu.memory_space<vmem>>, %arg2: memref<128x128xf32, #tpu.memory_space<vmem>>, %arg3: memref<256x128xf32, #tpu.memory_space<vmem>>, %arg4: memref<1x128xf32, #tpu.memory_space<vmem>>, %arg5: memref<8x8x128xf32, #tpu.memory_space<vmem>>, %arg6: memref<8x128xf32, #tpu.memory_space<vmem>>, %arg7: memref<8x128xf32, #tpu.memory_space<vmem>>) attributes {dimension_semantics = [#tpu.dimension_semantics<arbitrary>], iteration_bounds = array<i64: 1>, scalar_prefetch = 0 : i64, scratch_operands = 2 : i64, tpu.core_type = #tpu.core_type<tc>, window_params = [{transform_indices = @transform_0, window_bounds = array<i64: 8, 8, 128>}, {pipeline_mode = #tpu.pipeline_mode<synchronous>, transform_indices = @transform_1, window_bounds = array<i64: 128, 128>}, {pipeline_mode = #tpu.pipeline_mode<synchronous>, transform_indices = @transform_2, window_bounds = array<i64: 256, 128>}, {pipeline_mode = #tpu.pipeline_mode<synchronous>, transform_indices = @transform_3, window_bounds = array<i64: 1, 128>}, {transform_indices = @transform_4, window_bounds = array<i64: 8, 8, 128>}]} {
    %c0_i32 = arith.constant 0 : i32
    %0 = arith.cmpi eq, %arg0, %c0_i32 : i32
    %1 = arith.extui %0 : i1 to i32
    %c0_i32_0 = arith.constant 0 : i32
    %2 = arith.cmpi ne, %1, %c0_i32_0 : i32
    scf.if %2 {
      %cst_104 = arith.constant 0.000000e+00 : f32
      %151 = vector.broadcast %cst_104 : f32 to vector<8x128xf32>
      %c0_105 = arith.constant 0 : index
      %c0_106 = arith.constant 0 : index
      %152 = vector.load %arg6[%c0_105, %c0_106] : memref<8x128xf32, #tpu.memory_space<vmem>>, vector<8x128xf32>
      tpu.vector_store %arg6[%c0_105, %c0_106], %151 {strides = array<i32>} : memref<8x128xf32, #tpu.memory_space<vmem>>, vector<8x128xf32>,
      %cst_107 = arith.constant 0.000000e+00 : f32
      %153 = vector.broadcast %cst_107 : f32 to vector<8x128xf32>
      %c0_108 = arith.constant 0 : index
      %c0_109 = arith.constant 0 : index
      %154 = vector.load %arg7[%c0_108, %c0_109] : memref<8x128xf32, #tpu.memory_space<vmem>>, vector<8x128xf32>
      tpu.vector_store %arg7[%c0_108, %c0_109], %153 {strides = array<i32>} : memref<8x128xf32, #tpu.memory_space<vmem>>, vector<8x128xf32>,
    } else {
    }
    %c0 = arith.constant 0 : index
    %c0_1 = arith.constant 0 : index
    %3 = vector.load %arg6[%c0, %c0_1] : memref<8x128xf32, #tpu.memory_space<vmem>>, vector<8x128xf32>
    %c0_2 = arith.constant 0 : index
    %c0_3 = arith.constant 0 : index
    %4 = vector.load %arg7[%c0_2, %c0_3] : memref<8x128xf32, #tpu.memory_space<vmem>>, vector<8x128xf32>
    %c0_i32_4 = arith.constant 0 : i32
    %5 = arith.index_cast %c0_i32_4 : i32 to index
    %c0_5 = arith.constant 0 : index
    %c0_6 = arith.constant 0 : index
    %6 = vector.load %arg1[%5, %c0_5, %c0_6] : memref<8x8x128xf32, #tpu.memory_space<vmem>>, vector<1x8x128xf32>
    %7 = vector.shape_cast %6 : vector<1x8x128xf32> to vector<8x128xf32>
    %c0_7 = arith.constant 0 : index
    %c0_8 = arith.constant 0 : index
    %8 = vector.load %arg2[%c0_7, %c0_8] : memref<128x128xf32, #tpu.memory_space<vmem>>, vector<128x128xf32>
    %cst = arith.constant dense<0.000000e+00> : vector<8x128xf32>
    %9 = tpu.matmul %3, %8, %cst {dimension_numbers = #tpu.dot_dimension_numbers<[1], [0], [0], [1], [0, 0, 1, 1], [], []>} : vector<8x128xf32>, vector<128x128xf32>, vector<8x128xf32> -> vector<8x128xf32>
    %10 = arith.addf %7, %9 : vector<8x128xf32>
    %11 = math.tanh %10 : vector<8x128xf32>
    %12 = tpu.concatenate %11, %4 in 1 : vector<8x128xf32>, vector<8x128xf32> -> vector<8x256xf32>
    %c0_9 = arith.constant 0 : index
    %c0_10 = arith.constant 0 : index
    %13 = vector.load %arg3[%c0_9, %c0_10] : memref<256x128xf32, #tpu.memory_space<vmem>>, vector<256x128xf32>
    %cst_11 = arith.constant dense<0.000000e+00> : vector<8x128xf32>
    %14 = tpu.matmul %12, %13, %cst_11 {dimension_numbers = #tpu.dot_dimension_numbers<[1], [0], [0], [1], [0, 0, 1, 1], [], []>} : vector<8x256xf32>, vector<256x128xf32>, vector<8x128xf32> -> vector<8x128xf32>
    %c0_12 = arith.constant 0 : index
    %c0_13 = arith.constant 0 : index
    %15 = vector.load %arg4[%c0_12, %c0_13] : memref<1x128xf32, #tpu.memory_space<vmem>>, vector<1x128xf32>
    %16 = vector.broadcast %15 : vector<1x128xf32> to vector<8x128xf32>
    %17 = arith.addf %14, %16 : vector<8x128xf32>
    %18 = math.tanh %17 : vector<8x128xf32>
    %19 = arith.index_cast %c0_i32_4 : i32 to index
    %c0_14 = arith.constant 0 : index
    %c0_15 = arith.constant 0 : index
    %20 = vector.load %arg5[%19, %c0_14, %c0_15] : memref<8x8x128xf32, #tpu.memory_space<vmem>>, vector<1x8x128xf32>
    %21 = vector.shape_cast %20 : vector<1x8x128xf32> to vector<8x128xf32>
    %22 = vector.shape_cast %18 : vector<8x128xf32> to vector<1x8x128xf32>
    tpu.vector_store %arg5[%19, %c0_14, %c0_15], %22 {strides = array<i32>} : memref<8x8x128xf32, #tpu.memory_space<vmem>>, vector<1x8x128xf32>,
    %c1_i32 = arith.constant 1 : i32
    %23 = arith.index_cast %c1_i32 : i32 to index
    %c0_16 = arith.constant 0 : index
    %c0_17 = arith.constant 0 : index
    %24 = vector.load %arg1[%23, %c0_16, %c0_17] : memref<8x8x128xf32, #tpu.memory_space<vmem>>, vector<1x8x128xf32>
    %25 = vector.shape_cast %24 : vector<1x8x128xf32> to vector<8x128xf32>
    %c0_18 = arith.constant 0 : index
    %c0_19 = arith.constant 0 : index
    %26 = vector.load %arg2[%c0_18, %c0_19] : memref<128x128xf32, #tpu.memory_space<vmem>>, vector<128x128xf32>
    %cst_20 = arith.constant dense<0.000000e+00> : vector<8x128xf32>
    %27 = tpu.matmul %11, %26, %cst_20 {dimension_numbers = #tpu.dot_dimension_numbers<[1], [0], [0], [1], [0, 0, 1, 1], [], []>} : vector<8x128xf32>, vector<128x128xf32>, vector<8x128xf32> -> vector<8x128xf32>
    %28 = arith.addf %25, %27 : vector<8x128xf32>
    %29 = math.tanh %28 : vector<8x128xf32>
    %30 = tpu.concatenate %29, %18 in 1 : vector<8x128xf32>, vector<8x128xf32> -> vector<8x256xf32>
    %c0_21 = arith.constant 0 : index
    %c0_22 = arith.constant 0 : index
    %31 = vector.load %arg3[%c0_21, %c0_22] : memref<256x128xf32, #tpu.memory_space<vmem>>, vector<256x128xf32>
    %cst_23 = arith.constant dense<0.000000e+00> : vector<8x128xf32>
    %32 = tpu.matmul %30, %31, %cst_23 {dimension_numbers = #tpu.dot_dimension_numbers<[1], [0], [0], [1], [0, 0, 1, 1], [], []>} : vector<8x256xf32>, vector<256x128xf32>, vector<8x128xf32> -> vector<8x128xf32>
    %c0_24 = arith.constant 0 : index
    %c0_25 = arith.constant 0 : index
    %33 = vector.load %arg4[%c0_24, %c0_25] : memref<1x128xf32, #tpu.memory_space<vmem>>, vector<1x128xf32>
    %34 = vector.broadcast %33 : vector<1x128xf32> to vector<8x128xf32>
    %35 = arith.addf %32, %34 : vector<8x128xf32>
    %36 = math.tanh %35 : vector<8x128xf32>
    %37 = arith.index_cast %c1_i32 : i32 to index
    %c0_26 = arith.constant 0 : index
    %c0_27 = arith.constant 0 : index
    %38 = vector.load %arg5[%37, %c0_26, %c0_27] : memref<8x8x128xf32, #tpu.memory_space<vmem>>, vector<1x8x128xf32>
    %39 = vector.shape_cast %38 : vector<1x8x128xf32> to vector<8x128xf32>
    %40 = vector.shape_cast %36 : vector<8x128xf32> to vector<1x8x128xf32>
    tpu.vector_store %arg5[%37, %c0_26, %c0_27], %40 {strides = array<i32>} : memref<8x8x128xf32, #tpu.memory_space<vmem>>, vector<1x8x128xf32>,
    %c2_i32 = arith.constant 2 : i32
    %41 = arith.index_cast %c2_i32 : i32 to index
    %c0_28 = arith.constant 0 : index
    %c0_29 = arith.constant 0 : index
    %42 = vector.load %arg1[%41, %c0_28, %c0_29] : memref<8x8x128xf32, #tpu.memory_space<vmem>>, vector<1x8x128xf32>
    %43 = vector.shape_cast %42 : vector<1x8x128xf32> to vector<8x128xf32>
    %c0_30 = arith.constant 0 : index
    %c0_31 = arith.constant 0 : index
    %44 = vector.load %arg2[%c0_30, %c0_31] : memref<128x128xf32, #tpu.memory_space<vmem>>, vector<128x128xf32>
    %cst_32 = arith.constant dense<0.000000e+00> : vector<8x128xf32>
    %45 = tpu.matmul %29, %44, %cst_32 {dimension_numbers = #tpu.dot_dimension_numbers<[1], [0], [0], [1], [0, 0, 1, 1], [], []>} : vector<8x128xf32>, vector<128x128xf32>, vector<8x128xf32> -> vector<8x128xf32>
    %46 = arith.addf %43, %45 : vector<8x128xf32>
    %47 = math.tanh %46 : vector<8x128xf32>
    %48 = tpu.concatenate %47, %36 in 1 : vector<8x128xf32>, vector<8x128xf32> -> vector<8x256xf32>
    %c0_33 = arith.constant 0 : index
    %c0_34 = arith.constant 0 : index
    %49 = vector.load %arg3[%c0_33, %c0_34] : memref<256x128xf32, #tpu.memory_space<vmem>>, vector<256x128xf32>
    %cst_35 = arith.constant dense<0.000000e+00> : vector<8x128xf32>
    %50 = tpu.matmul %48, %49, %cst_35 {dimension_numbers = #tpu.dot_dimension_numbers<[1], [0], [0], [1], [0, 0, 1, 1], [], []>} : vector<8x256xf32>, vector<256x128xf32>, vector<8x128xf32> -> vector<8x128xf32>
    %c0_36 = arith.constant 0 : index
    %c0_37 = arith.constant 0 : index
    %51 = vector.load %arg4[%c0_36, %c0_37] : memref<1x128xf32, #tpu.memory_space<vmem>>, vector<1x128xf32>
    %52 = vector.broadcast %51 : vector<1x128xf32> to vector<8x128xf32>
    %53 = arith.addf %50, %52 : vector<8x128xf32>
    %54 = math.tanh %53 : vector<8x128xf32>
    %55 = arith.index_cast %c2_i32 : i32 to index
    %c0_38 = arith.constant 0 : index
    %c0_39 = arith.constant 0 : index
    %56 = vector.load %arg5[%55, %c0_38, %c0_39] : memref<8x8x128xf32, #tpu.memory_space<vmem>>, vector<1x8x128xf32>
    %57 = vector.shape_cast %56 : vector<1x8x128xf32> to vector<8x128xf32>
    %58 = vector.shape_cast %54 : vector<8x128xf32> to vector<1x8x128xf32>
    tpu.vector_store %arg5[%55, %c0_38, %c0_39], %58 {strides = array<i32>} : memref<8x8x128xf32, #tpu.memory_space<vmem>>, vector<1x8x128xf32>,
    %c3_i32 = arith.constant 3 : i32
    %59 = arith.index_cast %c3_i32 : i32 to index
    %c0_40 = arith.constant 0 : index
    %c0_41 = arith.constant 0 : index
    %60 = vector.load %arg1[%59, %c0_40, %c0_41] : memref<8x8x128xf32, #tpu.memory_space<vmem>>, vector<1x8x128xf32>
    %61 = vector.shape_cast %60 : vector<1x8x128xf32> to vector<8x128xf32>
    %c0_42 = arith.constant 0 : index
    %c0_43 = arith.constant 0 : index
    %62 = vector.load %arg2[%c0_42, %c0_43] : memref<128x128xf32, #tpu.memory_space<vmem>>, vector<128x128xf32>
    %cst_44 = arith.constant dense<0.000000e+00> : vector<8x128xf32>
    %63 = tpu.matmul %47, %62, %cst_44 {dimension_numbers = #tpu.dot_dimension_numbers<[1], [0], [0], [1], [0, 0, 1, 1], [], []>} : vector<8x128xf32>, vector<128x128xf32>, vector<8x128xf32> -> vector<8x128xf32>
    %64 = arith.addf %61, %63 : vector<8x128xf32>
    %65 = math.tanh %64 : vector<8x128xf32>
    %66 = tpu.concatenate %65, %54 in 1 : vector<8x128xf32>, vector<8x128xf32> -> vector<8x256xf32>
    %c0_45 = arith.constant 0 : index
    %c0_46 = arith.constant 0 : index
    %67 = vector.load %arg3[%c0_45, %c0_46] : memref<256x128xf32, #tpu.memory_space<vmem>>, vector<256x128xf32>
    %cst_47 = arith.constant dense<0.000000e+00> : vector<8x128xf32>
    %68 = tpu.matmul %66, %67, %cst_47 {dimension_numbers = #tpu.dot_dimension_numbers<[1], [0], [0], [1], [0, 0, 1, 1], [], []>} : vector<8x256xf32>, vector<256x128xf32>, vector<8x128xf32> -> vector<8x128xf32>
    %c0_48 = arith.constant 0 : index
    %c0_49 = arith.constant 0 : index
    %69 = vector.load %arg4[%c0_48, %c0_49] : memref<1x128xf32, #tpu.memory_space<vmem>>, vector<1x128xf32>
    %70 = vector.broadcast %69 : vector<1x128xf32> to vector<8x128xf32>
    %71 = arith.addf %68, %70 : vector<8x128xf32>
    %72 = math.tanh %71 : vector<8x128xf32>
    %73 = arith.index_cast %c3_i32 : i32 to index
    %c0_50 = arith.constant 0 : index
    %c0_51 = arith.constant 0 : index
    %74 = vector.load %arg5[%73, %c0_50, %c0_51] : memref<8x8x128xf32, #tpu.memory_space<vmem>>, vector<1x8x128xf32>
    %75 = vector.shape_cast %74 : vector<1x8x128xf32> to vector<8x128xf32>
    %76 = vector.shape_cast %72 : vector<8x128xf32> to vector<1x8x128xf32>
    tpu.vector_store %arg5[%73, %c0_50, %c0_51], %76 {strides = array<i32>} : memref<8x8x128xf32, #tpu.memory_space<vmem>>, vector<1x8x128xf32>,
    %c4_i32 = arith.constant 4 : i32
    %77 = arith.index_cast %c4_i32 : i32 to index
    %c0_52 = arith.constant 0 : index
    %c0_53 = arith.constant 0 : index
    %78 = vector.load %arg1[%77, %c0_52, %c0_53] : memref<8x8x128xf32, #tpu.memory_space<vmem>>, vector<1x8x128xf32>
    %79 = vector.shape_cast %78 : vector<1x8x128xf32> to vector<8x128xf32>
    %c0_54 = arith.constant 0 : index
    %c0_55 = arith.constant 0 : index
    %80 = vector.load %arg2[%c0_54, %c0_55] : memref<128x128xf32, #tpu.memory_space<vmem>>, vector<128x128xf32>
    %cst_56 = arith.constant dense<0.000000e+00> : vector<8x128xf32>
    %81 = tpu.matmul %65, %80, %cst_56 {dimension_numbers = #tpu.dot_dimension_numbers<[1], [0], [0], [1], [0, 0, 1, 1], [], []>} : vector<8x128xf32>, vector<128x128xf32>, vector<8x128xf32> -> vector<8x128xf32>
    %82 = arith.addf %79, %81 : vector<8x128xf32>
    %83 = math.tanh %82 : vector<8x128xf32>
    %84 = tpu.concatenate %83, %72 in 1 : vector<8x128xf32>, vector<8x128xf32> -> vector<8x256xf32>
    %c0_57 = arith.constant 0 : index
    %c0_58 = arith.constant 0 : index
    %85 = vector.load %arg3[%c0_57, %c0_58] : memref<256x128xf32, #tpu.memory_space<vmem>>, vector<256x128xf32>
    %cst_59 = arith.constant dense<0.000000e+00> : vector<8x128xf32>
    %86 = tpu.matmul %84, %85, %cst_59 {dimension_numbers = #tpu.dot_dimension_numbers<[1], [0], [0], [1], [0, 0, 1, 1], [], []>} : vector<8x256xf32>, vector<256x128xf32>, vector<8x128xf32> -> vector<8x128xf32>
    %c0_60 = arith.constant 0 : index
    %c0_61 = arith.constant 0 : index
    %87 = vector.load %arg4[%c0_60, %c0_61] : memref<1x128xf32, #tpu.memory_space<vmem>>, vector<1x128xf32>
    %88 = vector.broadcast %87 : vector<1x128xf32> to vector<8x128xf32>
    %89 = arith.addf %86, %88 : vector<8x128xf32>
    %90 = math.tanh %89 : vector<8x128xf32>
    %91 = arith.index_cast %c4_i32 : i32 to index
    %c0_62 = arith.constant 0 : index
    %c0_63 = arith.constant 0 : index
    %92 = vector.load %arg5[%91, %c0_62, %c0_63] : memref<8x8x128xf32, #tpu.memory_space<vmem>>, vector<1x8x128xf32>
    %93 = vector.shape_cast %92 : vector<1x8x128xf32> to vector<8x128xf32>
    %94 = vector.shape_cast %90 : vector<8x128xf32> to vector<1x8x128xf32>
    tpu.vector_store %arg5[%91, %c0_62, %c0_63], %94 {strides = array<i32>} : memref<8x8x128xf32, #tpu.memory_space<vmem>>, vector<1x8x128xf32>,
    %c5_i32 = arith.constant 5 : i32
    %95 = arith.index_cast %c5_i32 : i32 to index
    %c0_64 = arith.constant 0 : index
    %c0_65 = arith.constant 0 : index
    %96 = vector.load %arg1[%95, %c0_64, %c0_65] : memref<8x8x128xf32, #tpu.memory_space<vmem>>, vector<1x8x128xf32>
    %97 = vector.shape_cast %96 : vector<1x8x128xf32> to vector<8x128xf32>
    %c0_66 = arith.constant 0 : index
    %c0_67 = arith.constant 0 : index
    %98 = vector.load %arg2[%c0_66, %c0_67] : memref<128x128xf32, #tpu.memory_space<vmem>>, vector<128x128xf32>
    %cst_68 = arith.constant dense<0.000000e+00> : vector<8x128xf32>
    %99 = tpu.matmul %83, %98, %cst_68 {dimension_numbers = #tpu.dot_dimension_numbers<[1], [0], [0], [1], [0, 0, 1, 1], [], []>} : vector<8x128xf32>, vector<128x128xf32>, vector<8x128xf32> -> vector<8x128xf32>
    %100 = arith.addf %97, %99 : vector<8x128xf32>
    %101 = math.tanh %100 : vector<8x128xf32>
    %102 = tpu.concatenate %101, %90 in 1 : vector<8x128xf32>, vector<8x128xf32> -> vector<8x256xf32>
    %c0_69 = arith.constant 0 : index
    %c0_70 = arith.constant 0 : index
    %103 = vector.load %arg3[%c0_69, %c0_70] : memref<256x128xf32, #tpu.memory_space<vmem>>, vector<256x128xf32>
    %cst_71 = arith.constant dense<0.000000e+00> : vector<8x128xf32>
    %104 = tpu.matmul %102, %103, %cst_71 {dimension_numbers = #tpu.dot_dimension_numbers<[1], [0], [0], [1], [0, 0, 1, 1], [], []>} : vector<8x256xf32>, vector<256x128xf32>, vector<8x128xf32> -> vector<8x128xf32>
    %c0_72 = arith.constant 0 : index
    %c0_73 = arith.constant 0 : index
    %105 = vector.load %arg4[%c0_72, %c0_73] : memref<1x128xf32, #tpu.memory_space<vmem>>, vector<1x128xf32>
    %106 = vector.broadcast %105 : vector<1x128xf32> to vector<8x128xf32>
    %107 = arith.addf %104, %106 : vector<8x128xf32>
    %108 = math.tanh %107 : vector<8x128xf32>
    %109 = arith.index_cast %c5_i32 : i32 to index
    %c0_74 = arith.constant 0 : index
    %c0_75 = arith.constant 0 : index
    %110 = vector.load %arg5[%109, %c0_74, %c0_75] : memref<8x8x128xf32, #tpu.memory_space<vmem>>, vector<1x8x128xf32>
    %111 = vector.shape_cast %110 : vector<1x8x128xf32> to vector<8x128xf32>
    %112 = vector.shape_cast %108 : vector<8x128xf32> to vector<1x8x128xf32>
    tpu.vector_store %arg5[%109, %c0_74, %c0_75], %112 {strides = array<i32>} : memref<8x8x128xf32, #tpu.memory_space<vmem>>, vector<1x8x128xf32>,
    %c6_i32 = arith.constant 6 : i32
    %113 = arith.index_cast %c6_i32 : i32 to index
    %c0_76 = arith.constant 0 : index
    %c0_77 = arith.constant 0 : index
    %114 = vector.load %arg1[%113, %c0_76, %c0_77] : memref<8x8x128xf32, #tpu.memory_space<vmem>>, vector<1x8x128xf32>
    %115 = vector.shape_cast %114 : vector<1x8x128xf32> to vector<8x128xf32>
    %c0_78 = arith.constant 0 : index
    %c0_79 = arith.constant 0 : index
    %116 = vector.load %arg2[%c0_78, %c0_79] : memref<128x128xf32, #tpu.memory_space<vmem>>, vector<128x128xf32>
    %cst_80 = arith.constant dense<0.000000e+00> : vector<8x128xf32>
    %117 = tpu.matmul %101, %116, %cst_80 {dimension_numbers = #tpu.dot_dimension_numbers<[1], [0], [0], [1], [0, 0, 1, 1], [], []>} : vector<8x128xf32>, vector<128x128xf32>, vector<8x128xf32> -> vector<8x128xf32>
    %118 = arith.addf %115, %117 : vector<8x128xf32>
    %119 = math.tanh %118 : vector<8x128xf32>
    %120 = tpu.concatenate %119, %108 in 1 : vector<8x128xf32>, vector<8x128xf32> -> vector<8x256xf32>
    %c0_81 = arith.constant 0 : index
    %c0_82 = arith.constant 0 : index
    %121 = vector.load %arg3[%c0_81, %c0_82] : memref<256x128xf32, #tpu.memory_space<vmem>>, vector<256x128xf32>
    %cst_83 = arith.constant dense<0.000000e+00> : vector<8x128xf32>
    %122 = tpu.matmul %120, %121, %cst_83 {dimension_numbers = #tpu.dot_dimension_numbers<[1], [0], [0], [1], [0, 0, 1, 1], [], []>} : vector<8x256xf32>, vector<256x128xf32>, vector<8x128xf32> -> vector<8x128xf32>
    %c0_84 = arith.constant 0 : index
    %c0_85 = arith.constant 0 : index
    %123 = vector.load %arg4[%c0_84, %c0_85] : memref<1x128xf32, #tpu.memory_space<vmem>>, vector<1x128xf32>
    %124 = vector.broadcast %123 : vector<1x128xf32> to vector<8x128xf32>
    %125 = arith.addf %122, %124 : vector<8x128xf32>
    %126 = math.tanh %125 : vector<8x128xf32>
    %127 = arith.index_cast %c6_i32 : i32 to index
    %c0_86 = arith.constant 0 : index
    %c0_87 = arith.constant 0 : index
    %128 = vector.load %arg5[%127, %c0_86, %c0_87] : memref<8x8x128xf32, #tpu.memory_space<vmem>>, vector<1x8x128xf32>
    %129 = vector.shape_cast %128 : vector<1x8x128xf32> to vector<8x128xf32>
    %130 = vector.shape_cast %126 : vector<8x128xf32> to vector<1x8x128xf32>
    tpu.vector_store %arg5[%127, %c0_86, %c0_87], %130 {strides = array<i32>} : memref<8x8x128xf32, #tpu.memory_space<vmem>>, vector<1x8x128xf32>,
    %c7_i32 = arith.constant 7 : i32
    %131 = arith.index_cast %c7_i32 : i32 to index
    %c0_88 = arith.constant 0 : index
    %c0_89 = arith.constant 0 : index
    %132 = vector.load %arg1[%131, %c0_88, %c0_89] : memref<8x8x128xf32, #tpu.memory_space<vmem>>, vector<1x8x128xf32>
    %133 = vector.shape_cast %132 : vector<1x8x128xf32> to vector<8x128xf32>
    %c0_90 = arith.constant 0 : index
    %c0_91 = arith.constant 0 : index
    %134 = vector.load %arg2[%c0_90, %c0_91] : memref<128x128xf32, #tpu.memory_space<vmem>>, vector<128x128xf32>
    %cst_92 = arith.constant dense<0.000000e+00> : vector<8x128xf32>
    %135 = tpu.matmul %119, %134, %cst_92 {dimension_numbers = #tpu.dot_dimension_numbers<[1], [0], [0], [1], [0, 0, 1, 1], [], []>} : vector<8x128xf32>, vector<128x128xf32>, vector<8x128xf32> -> vector<8x128xf32>
    %136 = arith.addf %133, %135 : vector<8x128xf32>
    %137 = math.tanh %136 : vector<8x128xf32>
    %138 = tpu.concatenate %137, %126 in 1 : vector<8x128xf32>, vector<8x128xf32> -> vector<8x256xf32>
    %c0_93 = arith.constant 0 : index
    %c0_94 = arith.constant 0 : index
    %139 = vector.load %arg3[%c0_93, %c0_94] : memref<256x128xf32, #tpu.memory_space<vmem>>, vector<256x128xf32>
    %cst_95 = arith.constant dense<0.000000e+00> : vector<8x128xf32>
    %140 = tpu.matmul %138, %139, %cst_95 {dimension_numbers = #tpu.dot_dimension_numbers<[1], [0], [0], [1], [0, 0, 1, 1], [], []>} : vector<8x256xf32>, vector<256x128xf32>, vector<8x128xf32> -> vector<8x128xf32>
    %c0_96 = arith.constant 0 : index
    %c0_97 = arith.constant 0 : index
    %141 = vector.load %arg4[%c0_96, %c0_97] : memref<1x128xf32, #tpu.memory_space<vmem>>, vector<1x128xf32>
    %142 = vector.broadcast %141 : vector<1x128xf32> to vector<8x128xf32>
    %143 = arith.addf %140, %142 : vector<8x128xf32>
    %144 = math.tanh %143 : vector<8x128xf32>
    %145 = arith.index_cast %c7_i32 : i32 to index
    %c0_98 = arith.constant 0 : index
    %c0_99 = arith.constant 0 : index
    %146 = vector.load %arg5[%145, %c0_98, %c0_99] : memref<8x8x128xf32, #tpu.memory_space<vmem>>, vector<1x8x128xf32>
    %147 = vector.shape_cast %146 : vector<1x8x128xf32> to vector<8x128xf32>
    %148 = vector.shape_cast %144 : vector<8x128xf32> to vector<1x8x128xf32>
    tpu.vector_store %arg5[%145, %c0_98, %c0_99], %148 {strides = array<i32>} : memref<8x8x128xf32, #tpu.memory_space<vmem>>, vector<1x8x128xf32>,
    %c8_i32 = arith.constant 8 : i32
    %c0_100 = arith.constant 0 : index
    %c0_101 = arith.constant 0 : index
    %149 = vector.load %arg6[%c0_100, %c0_101] : memref<8x128xf32, #tpu.memory_space<vmem>>, vector<8x128xf32>
    tpu.vector_store %arg6[%c0_100, %c0_101], %137 {strides = array<i32>} : memref<8x128xf32, #tpu.memory_space<vmem>>, vector<8x128xf32>,
    %c0_102 = arith.constant 0 : index
    %c0_103 = arith.constant 0 : index
    %150 = vector.load %arg7[%c0_102, %c0_103] : memref<8x128xf32, #tpu.memory_space<vmem>>, vector<8x128xf32>
    tpu.vector_store %arg7[%c0_102, %c0_103], %144 {strides = array<i32>} : memref<8x128xf32, #tpu.memory_space<vmem>>, vector<8x128xf32>,
    return
  }
  func.func @transform_0(%arg0: i32) -> (i32, i32, i32) {
    %c0_i32 = arith.constant 0 : i32
    %c0_i32_0 = arith.constant 0 : i32
    %c0_i32_1 = arith.constant 0 : i32
    return %arg0, %c0_i32, %c0_i32_0 : i32, i32, i32
  }
  func.func @transform_1(%arg0: i32) -> (i32, i32) {
    %c0_i32 = arith.constant 0 : i32
    %c0_i32_0 = arith.constant 0 : i32
    %c0_i32_1 = arith.constant 0 : i32
    return %c0_i32, %c0_i32_0 : i32, i32
  }
  func.func @transform_2(%arg0: i32) -> (i32, i32) {
    %c0_i32 = arith.constant 0 : i32
    %c0_i32_0 = arith.constant 0 : i32
    %c0_i32_1 = arith.constant 0 : i32
    return %c0_i32, %c0_i32_0 : i32, i32
  }
  func.func @transform_3(%arg0: i32) -> (i32, i32) {
    %c0_i32 = arith.constant 0 : i32
    %c0_i32_0 = arith.constant 0 : i32
    %c0_i32_1 = arith.constant 0 : i32
    return %c0_i32, %c0_i32_0 : i32, i32
  }
  func.func @transform_4(%arg0: i32) -> (i32, i32, i32) {
    %c0_i32 = arith.constant 0 : i32
    %c0_i32_0 = arith.constant 0 : i32
    %c0_i32_1 = arith.constant 0 : i32
    return %arg0, %c0_i32, %c0_i32_0 : i32, i32, i32
  }
}

module attributes {stable_mosaic.version = 11 : i64} {
  func.func @_proj_kernel(%arg0: i32, %arg1: i32, %arg2: memref<8x8x128xf32, #tpu.memory_space<vmem>>, %arg3: memref<128x128xf32, #tpu.memory_space<vmem>>, %arg4: memref<1x128xf32, #tpu.memory_space<vmem>>, %arg5: memref<8x8x128xf32, #tpu.memory_space<vmem>>) attributes {dimension_semantics = [#tpu.dimension_semantics<parallel>, #tpu.dimension_semantics<parallel>], iteration_bounds = array<i64: 1, 1>, scalar_prefetch = 0 : i64, scratch_operands = 0 : i64, tpu.core_type = #tpu.core_type<tc>, window_params = [{transform_indices = @transform_0, window_bounds = array<i64: 8, 8, 128>}, {transform_indices = @transform_1, window_bounds = array<i64: 128, 128>}, {transform_indices = @transform_2, window_bounds = array<i64: 1, 128>}, {transform_indices = @transform_3, window_bounds = array<i64: 8, 8, 128>}]} {
    %c0 = arith.constant 0 : index
    %c0_0 = arith.constant 0 : index
    %c0_1 = arith.constant 0 : index
    %0 = vector.load %arg2[%c0, %c0_0, %c0_1] : memref<8x8x128xf32, #tpu.memory_space<vmem>>, vector<8x8x128xf32>
    %1 = vector.shape_cast %0 : vector<8x8x128xf32> to vector<64x128xf32>
    %c0_2 = arith.constant 0 : index
    %c0_3 = arith.constant 0 : index
    %2 = vector.load %arg3[%c0_2, %c0_3] : memref<128x128xf32, #tpu.memory_space<vmem>>, vector<128x128xf32>
    %cst = arith.constant dense<0.000000e+00> : vector<64x128xf32>
    %3 = tpu.matmul %1, %2, %cst {dimension_numbers = #tpu.dot_dimension_numbers<[1], [0], [0], [1], [0, 0, 1, 1], [], []>} : vector<64x128xf32>, vector<128x128xf32>, vector<64x128xf32> -> vector<64x128xf32>
    %c0_4 = arith.constant 0 : index
    %c0_5 = arith.constant 0 : index
    %4 = vector.load %arg4[%c0_4, %c0_5] : memref<1x128xf32, #tpu.memory_space<vmem>>, vector<1x128xf32>
    %5 = vector.broadcast %4 : vector<1x128xf32> to vector<64x128xf32>
    %6 = arith.addf %3, %5 : vector<64x128xf32>
    %7 = vector.shape_cast %6 : vector<64x128xf32> to vector<8x8x128xf32>
    %8 = tpu.transpose %7, [1, 0, 2] : vector<8x8x128xf32> -> vector<8x8x128xf32>
    %c0_6 = arith.constant 0 : index
    %c0_7 = arith.constant 0 : index
    %c0_8 = arith.constant 0 : index
    %9 = vector.load %arg5[%c0_6, %c0_7, %c0_8] : memref<8x8x128xf32, #tpu.memory_space<vmem>>, vector<8x8x128xf32>
    tpu.vector_store %arg5[%c0_6, %c0_7, %c0_8], %8 {strides = array<i32>} : memref<8x8x128xf32, #tpu.memory_space<vmem>>, vector<8x8x128xf32>,
    return
  }
  func.func @transform_0(%arg0: i32, %arg1: i32) -> (i32, i32, i32) {
    %c0_i32 = arith.constant 0 : i32
    %c0_i32_0 = arith.constant 0 : i32
    %c0_i32_1 = arith.constant 0 : i32
    return %arg0, %c0_i32, %c0_i32_0 : i32, i32, i32
  }
  func.func @transform_1(%arg0: i32, %arg1: i32) -> (i32, i32) {
    %c0_i32 = arith.constant 0 : i32
    %c0_i32_0 = arith.constant 0 : i32
    return %c0_i32, %arg1 : i32, i32
  }
  func.func @transform_2(%arg0: i32, %arg1: i32) -> (i32, i32) {
    %c0_i32 = arith.constant 0 : i32
    %c0_i32_0 = arith.constant 0 : i32
    return %c0_i32, %arg1 : i32, i32
  }
  func.func @transform_3(%arg0: i32, %arg1: i32) -> (i32, i32, i32) {
    %c0_i32 = arith.constant 0 : i32
    %c0_i32_0 = arith.constant 0 : i32
    return %c0_i32, %arg0, %arg1 : i32, i32, i32
  }
}

</mosaic_0001>

<llo_original>
// kernel: rnn_lm_forward.3
$region0: #{rnn_lm_forward.3}
  #allocation0 [shape = 'u32[]', space=smem, size = 0x4, offset = 0x4, fixed_abs, tag = 'smem constant byte address 0x4 - core index']
  #allocation1 [shape = 'u32[144,128]{1,0:T(1,128)}', space=vmem, size = 0x12000, scoped, tag = 'internal scratch']
  %s0 = inlined_call_operand.vmem [shape: f32[8,8,16], index: 0, kind: input, shape index: {}]
  %s1 = inlined_call_operand.vmem [shape: f32[16,128], index: 1, kind: input, shape index: {}]
  %s2 = inlined_call_operand.vmem [shape: f32[1,128], index: 2, kind: input, shape index: {}]
  %s3 = inlined_call_operand.vmem [shape: f32[8,8,128], index: 3, kind: output, shape index: {}]
  %s4 = sld [smem:[#allocation0]]
  $region22: #{rnn_lm_forward.3} parent=0
    _
  %s6 = ssub.s32 1, %s4
  %s7 = scalar_select 0, %s6, %s4
  // Predicated region
  $region2: #{rnn_lm_forward.3} parent=0 // pred_check
    _
  $region3: #{rnn_lm_forward.3} parent=0 // pred_check_branch
    %9 = sbr.rel (0) target = $region5
  $region4: #{rnn_lm_forward.3} parent=0 // pred_region
    _
  $region5: #{rnn_lm_forward.3} parent=0 // pred_fallthru
    _
  // Predicated region
  $region6: #{rnn_lm_forward.3} parent=0 // pred_check
    _
  $region7: #{rnn_lm_forward.3} parent=0 // pred_check_branch
    %11 = sbr.rel (0) target = $region9
  $region8: #{rnn_lm_forward.3} parent=0 // pred_region
    _
  $region9: #{rnn_lm_forward.3} parent=0 // pred_fallthru
    _
  // Predicated region
  $region10: #{rnn_lm_forward.3} parent=0 // pred_check
    _
  $region11: #{rnn_lm_forward.3} parent=0 // pred_check_branch
    %13 = sbr.rel (0) target = $region13
  $region12: #{rnn_lm_forward.3} parent=0 // pred_region
    _
  $region13: #{rnn_lm_forward.3} parent=0 // pred_fallthru
    _
  %v14 = vld [vmem:[%s0] sm:$0xff]
  %v15 = vld [vmem:[%s0 + $0x8] sm:$0xff]
  %v16 = vld [vmem:[%s0 + $0x10] sm:$0xff]
  %v17 = vld [vmem:[%s0 + $0x18] sm:$0xff]
  %v18 = vld [vmem:[%s0 + $0x20] sm:$0xff]
  %v19 = vld [vmem:[%s0 + $0x28] sm:$0xff]
  %v20 = vld [vmem:[%s0 + $0x30] sm:$0xff]
  %v21 = vld [vmem:[%s0 + $0x38] sm:$0xff]
  %v22 = vld [vmem:[%s1] sm:$0xff]
  %v23 = vld [vmem:[%s1 + $0x8] sm:$0xff]
  %v24 = vld [vmem:[%s2] sm:$0x1]
  %v26 = vlaneseq
  %v27 = vshrl.u32 %v26, 7
  %v28 = vsub.s32 0, %v27
  %v29 = vrot.slane %v24, %v28
  %vm31 = vcmask 130048
  %v33 = vsel %vm31, %v14, 0
  %v36 = vsel %vm31, %v15, 0
  %v39 = vsel %vm31, %v16, 0
  %v42 = vsel %vm31, %v17, 0
  %v45 = vsel %vm31, %v18, 0
  %v48 = vsel %vm31, %v19, 0
  %v51 = vsel %vm31, %v20, 0
  %v54 = vsel %vm31, %v21, 0
  %56 = vmatprep.subr.mxu0 0.0
  %57 = vmatpush1.msra.mxu0 0.0
  %58 = vmatprep.subr.mxu0 0.0
  %59 = vmatpush1.msra.mxu0 0.0
  %60 = vmatprep.subr.mxu0 0.0
  %61 = vmatpush1.msra.mxu0 0.0
  %62 = vmatprep.subr.mxu0 0.0
  %63 = vmatpush1.msra.mxu0 0.0
  %64 = vmatprep.subr.mxu0 0.0
  %65 = vmatpush1.msra.mxu0 0.0
  %66 = vmatprep.subr.mxu0 0.0
  %67 = vmatpush1.msra.mxu0 0.0
  %68 = vmatprep.subr.mxu0 0.0
  %69 = vmatpush1.msra.mxu0 0.0
  %70 = vmatprep.subr.mxu0 0.0
  %71 = vmatpush1.msra.mxu0 0.0
  %72 = vmatprep.subr.mxu0 0.0
  %73 = vmatpush1.msra.mxu0 0.0
  %74 = vmatprep.subr.mxu0 0.0
  %75 = vmatpush1.msra.mxu0 0.0
  %76 = vmatprep.subr.mxu0 0.0
  %77 = vmatpush1.msra.mxu0 0.0
  %78 = vmatprep.subr.mxu0 0.0
  %79 = vmatpush1.msra.mxu0 0.0
  %80 = vmatprep.subr.mxu0 0.0
  %81 = vmatpush1.msra.mxu0 0.0
  %82 = vmatprep.subr.mxu0 0.0
  %83 = vmatpush1.msra.mxu0 0.0
  %84 = vmatprep.subr.mxu0 0.0
  %85 = vmatpush1.msra.mxu0 %v23
  %86 = vmatprep.subr.mxu0 0.0
  %87 = vmatpush1.msra.mxu0 %v22
  %88 = vmatprep.subr.mxu0 0.0
  %89 = vmatpush2.msra.mxu0 0.0
  %90 = vmatprep.subr.mxu0 0.0
  %91 = vmatpush2.msra.mxu0 0.0
  %92 = vmatprep.subr.mxu0 0.0
  %93 = vmatpush2.msra.mxu0 0.0
  %94 = vmatprep.subr.mxu0 0.0
  %95 = vmatpush2.msra.mxu0 0.0
  %96 = vmatprep.subr.mxu0 0.0
  %97 = vmatpush2.msra.mxu0 0.0
  %98 = vmatprep.subr.mxu0 0.0
  %99 = vmatpush2.msra.mxu0 0.0
  %100 = vmatprep.subr.mxu0 0.0
  %101 = vmatpush2.msra.mxu0 0.0
  %102 = vmatprep.subr.mxu0 0.0
  %103 = vmatpush2.msra.mxu0 0.0
  %104 = vmatprep.subr.mxu0 0.0
  %105 = vmatpush2.msra.mxu0 0.0
  %106 = vmatprep.subr.mxu0 0.0
  %107 = vmatpush2.msra.mxu0 0.0
  %108 = vmatprep.subr.mxu0 0.0
  %109 = vmatpush2.msra.mxu0 0.0
  %110 = vmatprep.subr.mxu0 0.0
  %111 = vmatpush2.msra.mxu0 0.0
  %112 = vmatprep.subr.mxu0 0.0
  %113 = vmatpush2.msra.mxu0 0.0
  %114 = vmatprep.subr.mxu0 0.0
  %115 = vmatpush2.msra.mxu0 0.0
  %116 = vmatprep.subr.mxu0 0.0
  %117 = vmatpush2.msra.mxu0 0.0
  %118 = vmatprep.subr.mxu0 0.0
  %119 = vmatpush2.msra.mxu0 0.0
  %120 = vmatprep.mubr.f32.mxu0 0.0
  %121 = vmatmul.mubr.f32.gmra.mxu0 %v33
  %v122 = vpop.f32.mrf.mxu0
  %v123 = vadd.f32 %v29, %v122
  %v124 = vpop.f32.mrf.mxu0
  %125 = vmatprep.mubr.f32.mxu0 0.0
  %126 = vmatmul.mubr.f32.gmra.mxu0 %v36
  %v127 = vpop.f32.mrf.mxu0
  %v128 = vadd.f32 %v29, %v127
  %v129 = vpop.f32.mrf.mxu0
  %130 = vmatprep.mubr.f32.mxu0 0.0
  %131 = vmatmul.mubr.f32.gmra.mxu0 %v39
  %v132 = vpop.f32.mrf.mxu0
  %v133 = vadd.f32 %v29, %v132
  %v134 = vpop.f32.mrf.mxu0
  %135 = vmatprep.mubr.f32.mxu0 0.0
  %136 = vmatmul.mubr.f32.gmra.mxu0 %v42
  %v137 = vpop.f32.mrf.mxu0
  %v138 = vadd.f32 %v29, %v137
  %v139 = vpop.f32.mrf.mxu0
  %140 = vmatprep.mubr.f32.mxu0 0.0
  %141 = vmatmul.mubr.f32.gmra.mxu0 %v45
  %v142 = vpop.f32.mrf.mxu0
  %v143 = vadd.f32 %v29, %v142
  %v144 = vpop.f32.mrf.mxu0
  %145 = vmatprep.mubr.f32.mxu0 0.0
  %146 = vmatmul.mubr.f32.gmra.mxu0 %v48
  %v147 = vpop.f32.mrf.mxu0
  %v148 = vadd.f32 %v29, %v147
  %v149 = vpop.f32.mrf.mxu0
  %150 = vmatprep.mubr.f32.mxu0 0.0
  %151 = vmatmul.mubr.f32.gmra.mxu0 %v51
  %v152 = vpop.f32.mrf.mxu0
  %v153 = vadd.f32 %v29, %v152
  %v154 = vpop.f32.mrf.mxu0
  %155 = vmatprep.mubr.f32.mxu0 0.0
  %156 = vmatmul.mubr.f32.gmra.mxu0 %v54
  %v157 = vpop.f32.mrf.mxu0
  %v158 = vadd.f32 %v29, %v157
  %v159 = vpop.f32.mrf.mxu0
  %160 = vdwg.mxu0
  %161 = vst [vmem:[%s3] sm:$0xff] %v123
  %162 = vst [vmem:[%s3 + $0x8] sm:$0xff] %v128
  %163 = vst [vmem:[%s3 + $0x10] sm:$0xff] %v133
  %164 = vst [vmem:[%s3 + $0x18] sm:$0xff] %v138
  %165 = vst [vmem:[%s3 + $0x20] sm:$0xff] %v143
  %166 = vst [vmem:[%s3 + $0x28] sm:$0xff] %v148
  %167 = vst [vmem:[%s3 + $0x30] sm:$0xff] %v153
  %168 = vst [vmem:[%s3 + $0x38] sm:$0xff] %v158
  // Predicated region
  $region14: #{rnn_lm_forward.3} parent=0 // pred_check
    _
  $region15: #{rnn_lm_forward.3} parent=0 // pred_check_branch
    %170 = sbr.rel (0) target = $region17
  $region16: #{rnn_lm_forward.3} parent=0 // pred_region
    _
  $region17: #{rnn_lm_forward.3} parent=0 // pred_fallthru
    _
  // Predicated region
  $region18: #{rnn_lm_forward.3} parent=0 // pred_check
    _
  $region19: #{rnn_lm_forward.3} parent=0 // pred_check_branch
    %172 = sbr.rel (0) target = $region21
  $region20: #{rnn_lm_forward.3} parent=0 // pred_region
    _
  $region21: #{rnn_lm_forward.3} parent=0 // pred_fallthru
    _

// kernel: rnn_lm_forward.5
$region0: #{rnn_lm_forward.5}
  #allocation0 [shape = 'u32[]', space=smem, size = 0x4, offset = 0x4, fixed_abs, tag = 'smem constant byte address 0x4 - core index']
  #allocation1 [shape = 'u32[144,128]{1,0:T(1,128)}', space=vmem, size = 0x12000, scoped, tag = 'internal scratch']
  %s0 = inlined_call_operand.vmem [shape: f32[8,8,128], index: 0, kind: input, shape index: {}]
  %s1 = inlined_call_operand.vmem [shape: f32[128,128], index: 1, kind: input, shape index: {}]
  %s2 = inlined_call_operand.vmem [shape: f32[1,128], index: 2, kind: input, shape index: {}]
  %s3 = inlined_call_operand.vmem [shape: f32[8,8,128], index: 3, kind: output, shape index: {}]
  %s4 = sld [smem:[#allocation0]]
  $region22: #{rnn_lm_forward.5} parent=0
    _
  %s6 = ssub.s32 1, %s4
  %s7 = scalar_select 0, %s6, %s4
  // Predicated region
  $region2: #{rnn_lm_forward.5} parent=0 // pred_check
    _
  $region3: #{rnn_lm_forward.5} parent=0 // pred_check_branch
    %9 = sbr.rel (0) target = $region5
  $region4: #{rnn_lm_forward.5} parent=0 // pred_region
    _
  $region5: #{rnn_lm_forward.5} parent=0 // pred_fallthru
    _
  // Predicated region
  $region6: #{rnn_lm_forward.5} parent=0 // pred_check
    _
  $region7: #{rnn_lm_forward.5} parent=0 // pred_check_branch
    %11 = sbr.rel (0) target = $region9
  $region8: #{rnn_lm_forward.5} parent=0 // pred_region
    _
  $region9: #{rnn_lm_forward.5} parent=0 // pred_fallthru
    _
  // Predicated region
  $region10: #{rnn_lm_forward.5} parent=0 // pred_check
    _
  $region11: #{rnn_lm_forward.5} parent=0 // pred_check_branch
    %13 = sbr.rel (0) target = $region13
  $region12: #{rnn_lm_forward.5} parent=0 // pred_region
    _
  $region13: #{rnn_lm_forward.5} parent=0 // pred_fallthru
    _
  %v14 = vld [vmem:[%s0] sm:$0xff]
  %v15 = vld [vmem:[%s0 + $0x8] sm:$0xff]
  %v16 = vld [vmem:[%s0 + $0x10] sm:$0xff]
  %v17 = vld [vmem:[%s0 + $0x18] sm:$0xff]
  %v18 = vld [vmem:[%s0 + $0x20] sm:$0xff]
  %v19 = vld [vmem:[%s0 + $0x28] sm:$0xff]
  %v20 = vld [vmem:[%s0 + $0x30] sm:$0xff]
  %v21 = vld [vmem:[%s0 + $0x38] sm:$0xff]
  %v22 = vld [vmem:[%s1] sm:$0xff]
  %v23 = vld [vmem:[%s1 + $0x8] sm:$0xff]
  %v24 = vld [vmem:[%s1 + $0x10] sm:$0xff]
  %v25 = vld [vmem:[%s1 + $0x18] sm:$0xff]
  %v26 = vld [vmem:[%s1 + $0x20] sm:$0xff]
  %v27 = vld [vmem:[%s1 + $0x28] sm:$0xff]
  %v28 = vld [vmem:[%s1 + $0x30] sm:$0xff]
  %v29 = vld [vmem:[%s1 + $0x38] sm:$0xff]
  %v30 = vld [vmem:[%s1 + $0x40] sm:$0xff]
  %v31 = vld [vmem:[%s1 + $0x48] sm:$0xff]
  %v32 = vld [vmem:[%s1 + $0x50] sm:$0xff]
  %v33 = vld [vmem:[%s1 + $0x58] sm:$0xff]
  %v34 = vld [vmem:[%s1 + $0x60] sm:$0xff]
  %v35 = vld [vmem:[%s1 + $0x68] sm:$0xff]
  %v36 = vld [vmem:[%s1 + $0x70] sm:$0xff]
  %v37 = vld [vmem:[%s1 + $0x78] sm:$0xff]
  %v38 = vld [vmem:[%s2] sm:$0x1]
  %v40 = vlaneseq
  %v41 = vshrl.u32 %v40, 7
  %v42 = vsub.s32 0, %v41
  %v43 = vrot.slane %v38, %v42
  %45 = vmatprep.subr.mxu0 0.0
  %46 = vmatpush1.msra.mxu0 %v37
  %47 = vmatprep.subr.mxu0 0.0
  %48 = vmatpush1.msra.mxu0 %v36
  %49 = vmatprep.subr.mxu0 0.0
  %50 = vmatpush1.msra.mxu0 %v35
  %51 = vmatprep.subr.mxu0 0.0
  %52 = vmatpush1.msra.mxu0 %v34
  %53 = vmatprep.subr.mxu0 0.0
  %54 = vmatpush1.msra.mxu0 %v33
  %55 = vmatprep.subr.mxu0 0.0
  %56 = vmatpush1.msra.mxu0 %v32
  %57 = vmatprep.subr.mxu0 0.0
  %58 = vmatpush1.msra.mxu0 %v31
  %59 = vmatprep.subr.mxu0 0.0
  %60 = vmatpush1.msra.mxu0 %v30
  %61 = vmatprep.subr.mxu0 0.0
  %62 = vmatpush1.msra.mxu0 %v29
  %63 = vmatprep.subr.mxu0 0.0
  %64 = vmatpush1.msra.mxu0 %v28
  %65 = vmatprep.subr.mxu0 0.0
  %66 = vmatpush1.msra.mxu0 %v27
  %67 = vmatprep.subr.mxu0 0.0
  %68 = vmatpush1.msra.mxu0 %v26
  %69 = vmatprep.subr.mxu0 0.0
  %70 = vmatpush1.msra.mxu0 %v25
  %71 = vmatprep.subr.mxu0 0.0
  %72 = vmatpush1.msra.mxu0 %v24
  %73 = vmatprep.subr.mxu0 0.0
  %74 = vmatpush1.msra.mxu0 %v23
  %75 = vmatprep.subr.mxu0 0.0
  %76 = vmatpush1.msra.mxu0 %v22
  %77 = vmatprep.subr.mxu0 0.0
  %78 = vmatpush2.msra.mxu0 0.0
  %79 = vmatprep.subr.mxu0 0.0
  %80 = vmatpush2.msra.mxu0 0.0
  %81 = vmatprep.subr.mxu0 0.0
  %82 = vmatpush2.msra.mxu0 0.0
  %83 = vmatprep.subr.mxu0 0.0
  %84 = vmatpush2.msra.mxu0 0.0
  %85 = vmatprep.subr.mxu0 0.0
  %86 = vmatpush2.msra.mxu0 0.0
  %87 = vmatprep.subr.mxu0 0.0
  %88 = vmatpush2.msra.mxu0 0.0
  %89 = vmatprep.subr.mxu0 0.0
  %90 = vmatpush2.msra.mxu0 0.0
  %91 = vmatprep.subr.mxu0 0.0
  %92 = vmatpush2.msra.mxu0 0.0
  %93 = vmatprep.subr.mxu0 0.0
  %94 = vmatpush2.msra.mxu0 0.0
  %95 = vmatprep.subr.mxu0 0.0
  %96 = vmatpush2.msra.mxu0 0.0
  %97 = vmatprep.subr.mxu0 0.0
  %98 = vmatpush2.msra.mxu0 0.0
  %99 = vmatprep.subr.mxu0 0.0
  %100 = vmatpush2.msra.mxu0 0.0
  %101 = vmatprep.subr.mxu0 0.0
  %102 = vmatpush2.msra.mxu0 0.0
  %103 = vmatprep.subr.mxu0 0.0
  %104 = vmatpush2.msra.mxu0 0.0
  %105 = vmatprep.subr.mxu0 0.0
  %106 = vmatpush2.msra.mxu0 0.0
  %107 = vmatprep.subr.mxu0 0.0
  %108 = vmatpush2.msra.mxu0 0.0
  %109 = vmatprep.mubr.f32.mxu0 0.0
  %110 = vmatmul.mubr.f32.gmra.mxu0 %v14
  %v111 = vpop.f32.mrf.mxu0
  %v112 = vadd.f32 %v43, %v111
  %v113 = vpop.f32.mrf.mxu0
  %114 = vmatprep.mubr.f32.mxu0 0.0
  %115 = vmatmul.mubr.f32.gmra.mxu0 %v15
  %v116 = vpop.f32.mrf.mxu0
  %v117 = vadd.f32 %v43, %v116
  %v118 = vpop.f32.mrf.mxu0
  %119 = vmatprep.mubr.f32.mxu0 0.0
  %120 = vmatmul.mubr.f32.gmra.mxu0 %v16
  %v121 = vpop.f32.mrf.mxu0
  %v122 = vadd.f32 %v43, %v121
  %v123 = vpop.f32.mrf.mxu0
  %124 = vmatprep.mubr.f32.mxu0 0.0
  %125 = vmatmul.mubr.f32.gmra.mxu0 %v17
  %v126 = vpop.f32.mrf.mxu0
  %v127 = vadd.f32 %v43, %v126
  %v128 = vpop.f32.mrf.mxu0
  %129 = vmatprep.mubr.f32.mxu0 0.0
  %130 = vmatmul.mubr.f32.gmra.mxu0 %v18
  %v131 = vpop.f32.mrf.mxu0
  %v132 = vadd.f32 %v43, %v131
  %v133 = vpop.f32.mrf.mxu0
  %134 = vmatprep.mubr.f32.mxu0 0.0
  %135 = vmatmul.mubr.f32.gmra.mxu0 %v19
  %v136 = vpop.f32.mrf.mxu0
  %v137 = vadd.f32 %v43, %v136
  %v138 = vpop.f32.mrf.mxu0
  %139 = vmatprep.mubr.f32.mxu0 0.0
  %140 = vmatmul.mubr.f32.gmra.mxu0 %v20
  %v141 = vpop.f32.mrf.mxu0
  %v142 = vadd.f32 %v43, %v141
  %v143 = vpop.f32.mrf.mxu0
  %144 = vmatprep.mubr.f32.mxu0 0.0
  %145 = vmatmul.mubr.f32.gmra.mxu0 %v21
  %v146 = vpop.f32.mrf.mxu0
  %v147 = vadd.f32 %v43, %v146
  %v148 = vpop.f32.mrf.mxu0
  %149 = vdwg.mxu0
  %v150 = vcombine.low %v112, %v122
  %v151 = vcombine.high %v112, %v122
  %v153 = vunpack.c.l.s4 1983009808
  %v154 = vunpack.c.0.s8 %v153
  %v155 = vlaneseq
  %v156 = vshrl.u32 %v155, 7
  %v157 = vsub.s32 %v154, %v156
  %v158 = vrot.slane %v150, %v157
  %v160 = vunpack.c.l.s4 1983009808
  %v161 = vunpack.c.0.s8 %v160
  %v162 = vlaneseq
  %v163 = vshrl.u32 %v162, 7
  %v164 = vsub.s32 %v161, %v163
  %v165 = vrot.slane %v151, %v164
  %v166 = vcombine.low %v117, %v127
  %v167 = vcombine.high %v117, %v127
  %v169 = vunpack.c.l.s4 1983009808
  %v170 = vunpack.c.0.s8 %v169
  %v171 = vlaneseq
  %v172 = vshrl.u32 %v171, 7
  %v173 = vsub.s32 %v170, %v172
  %v174 = vrot.slane %v166, %v173
  %v176 = vunpack.c.l.s4 1983009808
  %v177 = vunpack.c.0.s8 %v176
  %v178 = vlaneseq
  %v179 = vshrl.u32 %v178, 7
  %v180 = vsub.s32 %v177, %v179
  %v181 = vrot.slane %v167, %v180
  %v182 = vcombine.low %v132, %v142
  %v183 = vcombine.high %v132, %v142
  %v185 = vunpack.c.l.s4 1983009808
  %v186 = vunpack.c.0.s8 %v185
  %v187 = vlaneseq
  %v188 = vshrl.u32 %v187, 7
  %v189 = vsub.s32 %v186, %v188
  %v190 = vrot.slane %v182, %v189
  %v192 = vunpack.c.l.s4 1983009808
  %v193 = vunpack.c.0.s8 %v192
  %v194 = vlaneseq
  %v195 = vshrl.u32 %v194, 7
  %v196 = vsub.s32 %v193, %v195
  %v197 = vrot.slane %v183, %v196
  %v198 = vcombine.low %v137, %v147
  %v199 = vcombine.high %v137, %v147
  %v201 = vunpack.c.l.s4 1983009808
  %v202 = vunpack.c.0.s8 %v201
  %v203 = vlaneseq
  %v204 = vshrl.u32 %v203, 7
  %v205 = vsub.s32 %v202, %v204
  %v206 = vrot.slane %v198, %v205
  %v208 = vunpack.c.l.s4 1983009808
  %v209 = vunpack.c.0.s8 %v208
  %v210 = vlaneseq
  %v211 = vshrl.u32 %v210, 7
  %v212 = vsub.s32 %v209, %v211
  %v213 = vrot.slane %v199, %v212
  %v214 = vcombine.low %v158, %v174
  %v215 = vcombine.high %v158, %v174
  %v217 = vunpack.c.l.s4 1934713408
  %v218 = vunpack.c.0.s8 %v217
  %v219 = vlaneseq
  %v220 = vshrl.u32 %v219, 7
  %v221 = vsub.s32 %v218, %v220
  %v222 = vrot.slane %v214, %v221
  %v224 = vunpack.c.l.s4 1934713408
  %v225 = vunpack.c.0.s8 %v224
  %v226 = vlaneseq
  %v227 = vshrl.u32 %v226, 7
  %v228 = vsub.s32 %v225, %v227
  %v229 = vrot.slane %v215, %v228
  %v230 = vcombine.low %v165, %v181
  %v231 = vcombine.high %v165, %v181
  %v233 = vunpack.c.l.s4 1934713408
  %v234 = vunpack.c.0.s8 %v233
  %v235 = vlaneseq
  %v236 = vshrl.u32 %v235, 7
  %v237 = vsub.s32 %v234, %v236
  %v238 = vrot.slane %v230, %v237
  %v240 = vunpack.c.l.s4 1934713408
  %v241 = vunpack.c.0.s8 %v240
  %v242 = vlaneseq
  %v243 = vshrl.u32 %v242, 7
  %v244 = vsub.s32 %v241, %v243
  %v245 = vrot.slane %v231, %v244
  %v246 = vcombine.low %v190, %v206
  %v247 = vcombine.high %v190, %v206
  %v249 = vunpack.c.l.s4 1934713408
  %v250 = vunpack.c.0.s8 %v249
  %v251 = vlaneseq
  %v252 = vshrl.u32 %v251, 7
  %v253 = vsub.s32 %v250, %v252
  %v254 = vrot.slane %v246, %v253
  %v256 = vunpack.c.l.s4 1934713408
  %v257 = vunpack.c.0.s8 %v256
  %v258 = vlaneseq
  %v259 = vshrl.u32 %v258, 7
  %v260 = vsub.s32 %v257, %v259
  %v261 = vrot.slane %v247, %v260
  %v262 = vcombine.low %v197, %v213
  %v263 = vcombine.high %v197, %v213
  %v265 = vunpack.c.l.s4 1934713408
  %v266 = vunpack.c.0.s8 %v265
  %v267 = vlaneseq
  %v268 = vshrl.u32 %v267, 7
  %v269 = vsub.s32 %v266, %v268
  %v270 = vrot.slane %v262, %v269
  %v272 = vunpack.c.l.s4 1934713408
  %v273 = vunpack.c.0.s8 %v272
  %v274 = vlaneseq
  %v275 = vshrl.u32 %v274, 7
  %v276 = vsub.s32 %v273, %v275
  %v277 = vrot.slane %v263, %v276
  %v278 = vcombine.low %v222, %v254
  %v279 = vcombine.high %v222, %v254
  %v280 = vcombine.low %v229, %v261
  %v281 = vcombine.high %v229, %v261
  %v282 = vcombine.low %v238, %v270
  %v283 = vcombine.high %v238, %v270
  %v284 = vcombine.low %v245, %v277
  %v285 = vcombine.high %v245, %v277
  %286 = vst [vmem:[%s3] sm:$0xff] %v278
  %287 = vst [vmem:[%s3 + $0x8] sm:$0xff] %v279
  %288 = vst [vmem:[%s3 + $0x10] sm:$0xff] %v280
  %289 = vst [vmem:[%s3 + $0x18] sm:$0xff] %v281
  %290 = vst [vmem:[%s3 + $0x20] sm:$0xff] %v282
  %291 = vst [vmem:[%s3 + $0x28] sm:$0xff] %v283
  %292 = vst [vmem:[%s3 + $0x30] sm:$0xff] %v284
  %293 = vst [vmem:[%s3 + $0x38] sm:$0xff] %v285
  // Predicated region
  $region14: #{rnn_lm_forward.5} parent=0 // pred_check
    _
  $region15: #{rnn_lm_forward.5} parent=0 // pred_check_branch
    %295 = sbr.rel (0) target = $region17
  $region16: #{rnn_lm_forward.5} parent=0 // pred_region
    _
  $region17: #{rnn_lm_forward.5} parent=0 // pred_fallthru
    _
  // Predicated region
  $region18: #{rnn_lm_forward.5} parent=0 // pred_check
    _
  $region19: #{rnn_lm_forward.5} parent=0 // pred_check_branch
    %297 = sbr.rel (0) target = $region21
  $region20: #{rnn_lm_forward.5} parent=0 // pred_region
    _
  $region21: #{rnn_lm_forward.5} parent=0 // pred_fallthru
    _

// kernel: rnn_lm_forward.4
$region0: #{rnn_lm_forward.4}
  #allocation0 [shape = 'u32[]', space=smem, size = 0x4, offset = 0x4, fixed_abs, tag = 'smem constant byte address 0x4 - core index']
  #allocation1 [shape = 'u32[144,128]{1,0:T(1,128)}', space=vmem, size = 0x12000, scoped, tag = 'internal scratch']
  #allocation2 [shape = 'f32[8,128]{1,0:T(8,128)}', space=vmem, size = 0x1000, scoped, tag = 'scratch operand']
  #allocation3 [shape = 'f32[8,128]{1,0:T(8,128)}', space=vmem, size = 0x1000, scoped, tag = 'scratch operand']
  %s0 = inlined_call_operand.vmem [shape: f32[8,8,128], index: 0, kind: input, shape index: {}]
  %s1 = inlined_call_operand.vmem [shape: f32[128,128], index: 1, kind: input, shape index: {}]
  %s2 = inlined_call_operand.vmem [shape: f32[256,128], index: 2, kind: input, shape index: {}]
  %s3 = inlined_call_operand.vmem [shape: f32[1,128], index: 3, kind: input, shape index: {}]
  %s4 = inlined_call_operand.vmem [shape: f32[8,8,128], index: 4, kind: output, shape index: {}]
  %s5 = sld [smem:[#allocation0]]
  $region30: #{rnn_lm_forward.4} parent=0
    _
  %s7 = ssub.s32 1, %s5
  %s8 = scalar_select 0, %s7, %s5
  // Predicated region
  $region2: #{rnn_lm_forward.4} parent=0 // pred_check
    _
  $region3: #{rnn_lm_forward.4} parent=0 // pred_check_branch
    %10 = sbr.rel (0) target = $region5
  $region4: #{rnn_lm_forward.4} parent=0 // pred_region
    _
  $region5: #{rnn_lm_forward.4} parent=0 // pred_fallthru
    _
  // Predicated region
  $region6: #{rnn_lm_forward.4} parent=0 // pred_check
    _
  $region7: #{rnn_lm_forward.4} parent=0 // pred_check_branch
    %12 = sbr.rel (0) target = $region9
  $region8: #{rnn_lm_forward.4} parent=0 // pred_region
    _
  $region9: #{rnn_lm_forward.4} parent=0 // pred_fallthru
    _
  // Predicated region
  $region10: #{rnn_lm_forward.4} parent=0 // pred_check
    _
  $region11: #{rnn_lm_forward.4} parent=0 // pred_check_branch
    %14 = sbr.rel (0) target = $region13
  $region12: #{rnn_lm_forward.4} parent=0 // pred_region
    _
  $region13: #{rnn_lm_forward.4} parent=0 // pred_fallthru
    _
  // Predicated region
  $region14: #{rnn_lm_forward.4} parent=0 // pred_check
    _
  $region15: #{rnn_lm_forward.4} parent=0 // pred_check_branch
    %16 = sbr.rel (0) target = $region17
  $region16: #{rnn_lm_forward.4} parent=0 // pred_region
    _
  $region17: #{rnn_lm_forward.4} parent=0 // pred_fallthru
    _
  %p17 = scmp.eq.s32.totalorder 0, 0
  // Predicated region
  $region18: #{rnn_lm_forward.4} parent=0 // pred_check
    %p18 = pneg %p17
  $region19: #{rnn_lm_forward.4} parent=0 // pred_check_branch
    %20 = sbr.rel (%p18) target = $region21
  $region20: #{rnn_lm_forward.4} parent=0 // pred_region
    %21 = vst [vmem:[#allocation2] sm:$0xff] 0.0
    %22 = vst [vmem:[#allocation3] sm:$0xff] 0.0
  $region21: #{rnn_lm_forward.4} parent=0 // pred_fallthru
    _
  %v23 = vld [vmem:[#allocation2] sm:$0xff]
  %v24 = vld [vmem:[#allocation3] sm:$0xff]
  %v25 = vld [vmem:[%s0] sm:$0xff]
  %v26 = vld [vmem:[%s1] sm:$0xff]
  %v27 = vld [vmem:[%s1 + $0x8] sm:$0xff]
  %v28 = vld [vmem:[%s1 + $0x10] sm:$0xff]
  %v29 = vld [vmem:[%s1 + $0x18] sm:$0xff]
  %v30 = vld [vmem:[%s1 + $0x20] sm:$0xff]
  %v31 = vld [vmem:[%s1 + $0x28] sm:$0xff]
  %v32 = vld [vmem:[%s1 + $0x30] sm:$0xff]
  %v33 = vld [vmem:[%s1 + $0x38] sm:$0xff]
  %v34 = vld [vmem:[%s1 + $0x40] sm:$0xff]
  %v35 = vld [vmem:[%s1 + $0x48] sm:$0xff]
  %v36 = vld [vmem:[%s1 + $0x50] sm:$0xff]
  %v37 = vld [vmem:[%s1 + $0x58] sm:$0xff]
  %v38 = vld [vmem:[%s1 + $0x60] sm:$0xff]
  %v39 = vld [vmem:[%s1 + $0x68] sm:$0xff]
  %v40 = vld [vmem:[%s1 + $0x70] sm:$0xff]
  %v41 = vld [vmem:[%s1 + $0x78] sm:$0xff]
  %42 = vmatprep.subr.mxu0 0.0
  %43 = vmatpush1.msra.mxu0 %v41
  %44 = vmatprep.subr.mxu0 0.0
  %45 = vmatpush1.msra.mxu0 %v40
  %46 = vmatprep.subr.mxu0 0.0
  %47 = vmatpush1.msra.mxu0 %v39
  %48 = vmatprep.subr.mxu0 0.0
  %49 = vmatpush1.msra.mxu0 %v38
  %50 = vmatprep.subr.mxu0 0.0
  %51 = vmatpush1.msra.mxu0 %v37
  %52 = vmatprep.subr.mxu0 0.0
  %53 = vmatpush1.msra.mxu0 %v36
  %54 = vmatprep.subr.mxu0 0.0
  %55 = vmatpush1.msra.mxu0 %v35
  %56 = vmatprep.subr.mxu0 0.0
  %57 = vmatpush1.msra.mxu0 %v34
  %58 = vmatprep.subr.mxu0 0.0
  %59 = vmatpush1.msra.mxu0 %v33
  %60 = vmatprep.subr.mxu0 0.0
  %61 = vmatpush1.msra.mxu0 %v32
  %62 = vmatprep.subr.mxu0 0.0
  %63 = vmatpush1.msra.mxu0 %v31
  %64 = vmatprep.subr.mxu0 0.0
  %65 = vmatpush1.msra.mxu0 %v30
  %66 = vmatprep.subr.mxu0 0.0
  %67 = vmatpush1.msra.mxu0 %v29
  %68 = vmatprep.subr.mxu0 0.0
  %69 = vmatpush1.msra.mxu0 %v28
  %70 = vmatprep.subr.mxu0 0.0
  %71 = vmatpush1.msra.mxu0 %v27
  %72 = vmatprep.subr.mxu0 0.0
  %73 = vmatpush1.msra.mxu0 %v26
  %74 = vmatprep.subr.mxu0 0.0
  %75 = vmatpush2.msra.mxu0 0.0
  %76 = vmatprep.subr.mxu0 0.0
  %77 = vmatpush2.msra.mxu0 0.0
  %78 = vmatprep.subr.mxu0 0.0
  %79 = vmatpush2.msra.mxu0 0.0
  %80 = vmatprep.subr.mxu0 0.0
  %81 = vmatpush2.msra.mxu0 0.0
  %82 = vmatprep.subr.mxu0 0.0
  %83 = vmatpush2.msra.mxu0 0.0
  %84 = vmatprep.subr.mxu0 0.0
  %85 = vmatpush2.msra.mxu0 0.0
  %86 = vmatprep.subr.mxu0 0.0
  %87 = vmatpush2.msra.mxu0 0.0
  %88 = vmatprep.subr.mxu0 0.0
  %89 = vmatpush2.msra.mxu0 0.0
  %90 = vmatprep.subr.mxu0 0.0
  %91 = vmatpush2.msra.mxu0 0.0
  %92 = vmatprep.subr.mxu0 0.0
  %93 = vmatpush2.msra.mxu0 0.0
  %94 = vmatprep.subr.mxu0 0.0
  %95 = vmatpush2.msra.mxu0 0.0
  %96 = vmatprep.subr.mxu0 0.0
  %97 = vmatpush2.msra.mxu0 0.0
  %98 = vmatprep.subr.mxu0 0.0
  %99 = vmatpush2.msra.mxu0 0.0
  %100 = vmatprep.subr.mxu0 0.0
  %101 = vmatpush2.msra.mxu0 0.0
  %102 = vmatprep.subr.mxu0 0.0
  %103 = vmatpush2.msra.mxu0 0.0
  %104 = vmatprep.subr.mxu0 0.0
  %105 = vmatpush2.msra.mxu0 0.0
  %106 = vmatprep.mubr.f32.mxu0 0.0
  %107 = vmatmul.mubr.f32.gmra.mxu0 %v23
  %v108 = vpop.f32.mrf.mxu0
  %v109 = vadd.f32 0.0, %v108
  %v110 = vpop.f32.mrf.mxu0
  %111 = vdwg.mxu0
  %v112 = vadd.f32 %v25, %v109
  %v113 = vtanh.pop %v112
  %v114 = vld [vmem:[%s2] sm:$0xff]
  %v115 = vld [vmem:[%s2 + $0x8] sm:$0xff]
  %v116 = vld [vmem:[%s2 + $0x10] sm:$0xff]
  %v117 = vld [vmem:[%s2 + $0x18] sm:$0xff]
  %v118 = vld [vmem:[%s2 + $0x20] sm:$0xff]
  %v119 = vld [vmem:[%s2 + $0x28] sm:$0xff]
  %v120 = vld [vmem:[%s2 + $0x30] sm:$0xff]
  %v121 = vld [vmem:[%s2 + $0x38] sm:$0xff]
  %v122 = vld [vmem:[%s2 + $0x40] sm:$0xff]
  %v123 = vld [vmem:[%s2 + $0x48] sm:$0xff]
  %v124 = vld [vmem:[%s2 + $0x50] sm:$0xff]
  %v125 = vld [vmem:[%s2 + $0x58] sm:$0xff]
  %v126 = vld [vmem:[%s2 + $0x60] sm:$0xff]
  %v127 = vld [vmem:[%s2 + $0x68] sm:$0xff]
  %v128 = vld [vmem:[%s2 + $0x70] sm:$0xff]
  %v129 = vld [vmem:[%s2 + $0x78] sm:$0xff]
  %v130 = vld [vmem:[%s2 + $0x80] sm:$0xff]
  %v131 = vld [vmem:[%s2 + $0x88] sm:$0xff]
  %v132 = vld [vmem:[%s2 + $0x90] sm:$0xff]
  %v133 = vld [vmem:[%s2 + $0x98] sm:$0xff]
  %v134 = vld [vmem:[%s2 + $0xa0] sm:$0xff]
  %v135 = vld [vmem:[%s2 + $0xa8] sm:$0xff]
  %v136 = vld [vmem:[%s2 + $0xb0] sm:$0xff]
  %v137 = vld [vmem:[%s2 + $0xb8] sm:$0xff]
  %v138 = vld [vmem:[%s2 + $0xc0] sm:$0xff]
  %v139 = vld [vmem:[%s2 + $0xc8] sm:$0xff]
  %v140 = vld [vmem:[%s2 + $0xd0] sm:$0xff]
  %v141 = vld [vmem:[%s2 + $0xd8] sm:$0xff]
  %v142 = vld [vmem:[%s2 + $0xe0] sm:$0xff]
  %v143 = vld [vmem:[%s2 + $0xe8] sm:$0xff]
  %v144 = vld [vmem:[%s2 + $0xf0] sm:$0xff]
  %v145 = vld [vmem:[%s2 + $0xf8] sm:$0xff]
  %v146 = vld [vmem:[%s3] sm:$0x1]
  %v148 = vlaneseq
  %v149 = vshrl.u32 %v148, 7
  %v150 = vsub.s32 0, %v149
  %v151 = vrot.slane %v146, %v150
  %153 = vmatprep.subr.mxu0 0.0
  %154 = vmatpush1.msra.mxu0 %v129
  %155 = vmatprep.subr.mxu0 0.0
  %156 = vmatpush1.msra.mxu0 %v128
  %157 = vmatprep.subr.mxu0 0.0
  %158 = vmatpush1.msra.mxu0 %v127
  %159 = vmatprep.subr.mxu0 0.0
  %160 = vmatpush1.msra.mxu0 %v126
  %161 = vmatprep.subr.mxu0 0.0
  %162 = vmatpush1.msra.mxu0 %v125
  %163 = vmatprep.subr.mxu0 0.0
  %164 = vmatpush1.msra.mxu0 %v124
  %165 = vmatprep.subr.mxu0 0.0
  %166 = vmatpush1.msra.mxu0 %v123
  %167 = vmatprep.subr.mxu0 0.0
  %168 = vmatpush1.msra.mxu0 %v122
  %169 = vmatprep.subr.mxu0 0.0
  %170 = vmatpush1.msra.mxu0 %v121
  %171 = vmatprep.subr.mxu0 0.0
  %172 = vmatpush1.msra.mxu0 %v120
  %173 = vmatprep.subr.mxu0 0.0
  %174 = vmatpush1.msra.mxu0 %v119
  %175 = vmatprep.subr.mxu0 0.0
  %176 = vmatpush1.msra.mxu0 %v118
  %177 = vmatprep.subr.mxu0 0.0
  %178 = vmatpush1.msra.mxu0 %v117
  %179 = vmatprep.subr.mxu0 0.0
  %180 = vmatpush1.msra.mxu0 %v116
  %181 = vmatprep.subr.mxu0 0.0
  %182 = vmatpush1.msra.mxu0 %v115
  %183 = vmatprep.subr.mxu0 0.0
  %184 = vmatpush1.msra.mxu0 %v114
  %185 = vmatprep.subr.mxu0 0.0
  %186 = vmatpush2.msra.mxu0 %v145
  %187 = vmatprep.subr.mxu0 0.0
  %188 = vmatpush2.msra.mxu0 %v144
  %189 = vmatprep.subr.mxu0 0.0
  %190 = vmatpush2.msra.mxu0 %v143
  %191 = vmatprep.subr.mxu0 0.0
  %192 = vmatpush2.msra.mxu0 %v142
  %193 = vmatprep.subr.mxu0 0.0
  %194 = vmatpush2.msra.mxu0 %v141
  %195 = vmatprep.subr.mxu0 0.0
  %196 = vmatpush2.msra.mxu0 %v140
  %197 = vmatprep.subr.mxu0 0.0
  %198 = vmatpush2.msra.mxu0 %v139
  %199 = vmatprep.subr.mxu0 0.0
  %200 = vmatpush2.msra.mxu0 %v138
  %201 = vmatprep.subr.mxu0 0.0
  %202 = vmatpush2.msra.mxu0 %v137
  %203 = vmatprep.subr.mxu0 0.0
  %204 = vmatpush2.msra.mxu0 %v136
  %205 = vmatprep.subr.mxu0 0.0
  %206 = vmatpush2.msra.mxu0 %v135
  %207 = vmatprep.subr.mxu0 0.0
  %208 = vmatpush2.msra.mxu0 %v134
  %209 = vmatprep.subr.mxu0 0.0
  %210 = vmatpush2.msra.mxu0 %v133
  %211 = vmatprep.subr.mxu0 0.0
  %212 = vmatpush2.msra.mxu0 %v132
  %213 = vmatprep.subr.mxu0 0.0
  %214 = vmatpush2.msra.mxu0 %v131
  %215 = vmatprep.subr.mxu0 0.0
  %216 = vmatpush2.msra.mxu0 %v130
  %217 = vmatprep.mubr.f32.mxu0 %v24
  %218 = vmatmul.mubr.f32.gmra.mxu0 %v113
  %v219 = vpop.f32.mrf.mxu0
  %v220 = vadd.f32 %v151, %v219
  %v221 = vpop.f32.mrf.mxu0
  %222 = vdwg.mxu0
  %v223 = vtanh.pop %v220
  %224 = vst [vmem:[%s4] sm:$0xff] %v223
  %s225 = scalar_lea.vmem %s0, 8
  %v226 = vld [vmem:[%s225] sm:$0xff]
  %v227 = vld [vmem:[%s1] sm:$0xff]
  %v228 = vld [vmem:[%s1 + $0x8] sm:$0xff]
  %v229 = vld [vmem:[%s1 + $0x10] sm:$0xff]
  %v230 = vld [vmem:[%s1 + $0x18] sm:$0xff]
  %v231 = vld [vmem:[%s1 + $0x20] sm:$0xff]
  %v232 = vld [vmem:[%s1 + $0x28] sm:$0xff]
  %v233 = vld [vmem:[%s1 + $0x30] sm:$0xff]
  %v234 = vld [vmem:[%s1 + $0x38] sm:$0xff]
  %v235 = vld [vmem:[%s1 + $0x40] sm:$0xff]
  %v236 = vld [vmem:[%s1 + $0x48] sm:$0xff]
  %v237 = vld [vmem:[%s1 + $0x50] sm:$0xff]
  %v238 = vld [vmem:[%s1 + $0x58] sm:$0xff]
  %v239 = vld [vmem:[%s1 + $0x60] sm:$0xff]
  %v240 = vld [vmem:[%s1 + $0x68] sm:$0xff]
  %v241 = vld [vmem:[%s1 + $0x70] sm:$0xff]
  %v242 = vld [vmem:[%s1 + $0x78] sm:$0xff]
  %243 = vmatprep.subr.mxu0 0.0
  %244 = vmatpush1.msra.mxu0 %v242
  %245 = vmatprep.subr.mxu0 0.0
  %246 = vmatpush1.msra.mxu0 %v241
  %247 = vmatprep.subr.mxu0 0.0
  %248 = vmatpush1.msra.mxu0 %v240
  %249 = vmatprep.subr.mxu0 0.0
  %250 = vmatpush1.msra.mxu0 %v239
  %251 = vmatprep.subr.mxu0 0.0
  %252 = vmatpush1.msra.mxu0 %v238
  %253 = vmatprep.subr.mxu0 0.0
  %254 = vmatpush1.msra.mxu0 %v237
  %255 = vmatprep.subr.mxu0 0.0
  %256 = vmatpush1.msra.mxu0 %v236
  %257 = vmatprep.subr.mxu0 0.0
  %258 = vmatpush1.msra.mxu0 %v235
  %259 = vmatprep.subr.mxu0 0.0
  %260 = vmatpush1.msra.mxu0 %v234
  %261 = vmatprep.subr.mxu0 0.0
  %262 = vmatpush1.msra.mxu0 %v233
  %263 = vmatprep.subr.mxu0 0.0
  %264 = vmatpush1.msra.mxu0 %v232
  %265 = vmatprep.subr.mxu0 0.0
  %266 = vmatpush1.msra.mxu0 %v231
  %267 = vmatprep.subr.mxu0 0.0
  %268 = vmatpush1.msra.mxu0 %v230
  %269 = vmatprep.subr.mxu0 0.0
  %270 = vmatpush1.msra.mxu0 %v229
  %271 = vmatprep.subr.mxu0 0.0
  %272 = vmatpush1.msra.mxu0 %v228
  %273 = vmatprep.subr.mxu0 0.0
  %274 = vmatpush1.msra.mxu0 %v227
  %275 = vmatprep.subr.mxu0 0.0
  %276 = vmatpush2.msra.mxu0 0.0
  %277 = vmatprep.subr.mxu0 0.0
  %278 = vmatpush2.msra.mxu0 0.0
  %279 = vmatprep.subr.mxu0 0.0
  %280 = vmatpush2.msra.mxu0 0.0
  %281 = vmatprep.subr.mxu0 0.0
  %282 = vmatpush2.msra.mxu0 0.0
  %283 = vmatprep.subr.mxu0 0.0
  %284 = vmatpush2.msra.mxu0 0.0
  %285 = vmatprep.subr.mxu0 0.0
  %286 = vmatpush2.msra.mxu0 0.0
  %287 = vmatprep.subr.mxu0 0.0
  %288 = vmatpush2.msra.mxu0 0.0
  %289 = vmatprep.subr.mxu0 0.0
  %290 = vmatpush2.msra.mxu0 0.0
  %291 = vmatprep.subr.mxu0 0.0
  %292 = vmatpush2.msra.mxu0 0.0
  %293 = vmatprep.subr.mxu0 0.0
  %294 = vmatpush2.msra.mxu0 0.0
  %295 = vmatprep.subr.mxu0 0.0
  %296 = vmatpush2.msra.mxu0 0.0
  %297 = vmatprep.subr.mxu0 0.0
  %298 = vmatpush2.msra.mxu0 0.0
  %299 = vmatprep.subr.mxu0 0.0
  %300 = vmatpush2.msra.mxu0 0.0
  %301 = vmatprep.subr.mxu0 0.0
  %302 = vmatpush2.msra.mxu0 0.0
  %303 = vmatprep.subr.mxu0 0.0
  %304 = vmatpush2.msra.mxu0 0.0
  %305 = vmatprep.subr.mxu0 0.0
  %306 = vmatpush2.msra.mxu0 0.0
  %307 = vmatprep.mubr.f32.mxu0 0.0
  %308 = vmatmul.mubr.f32.gmra.mxu0 %v113
  %v309 = vpop.f32.mrf.mxu0
  %v310 = vadd.f32 0.0, %v309
  %v311 = vpop.f32.mrf.mxu0
  %312 = vdwg.mxu0
  %v313 = vadd.f32 %v226, %v310
  %v314 = vtanh.pop %v313
  %v315 = vld [vmem:[%s2] sm:$0xff]
  %v316 = vld [vmem:[%s2 + $0x8] sm:$0xff]
  %v317 = vld [vmem:[%s2 + $0x10] sm:$0xff]
  %v318 = vld [vmem:[%s2 + $0x18] sm:$0xff]
  %v319 = vld [vmem:[%s2 + $0x20] sm:$0xff]
  %v320 = vld [vmem:[%s2 + $0x28] sm:$0xff]
  %v321 = vld [vmem:[%s2 + $0x30] sm:$0xff]
  %v322 = vld [vmem:[%s2 + $0x38] sm:$0xff]
  %v323 = vld [vmem:[%s2 + $0x40] sm:$0xff]
  %v324 = vld [vmem:[%s2 + $0x48] sm:$0xff]
  %v325 = vld [vmem:[%s2 + $0x50] sm:$0xff]
  %v326 = vld [vmem:[%s2 + $0x58] sm:$0xff]
  %v327 = vld [vmem:[%s2 + $0x60] sm:$0xff]
  %v328 = vld [vmem:[%s2 + $0x68] sm:$0xff]
  %v329 = vld [vmem:[%s2 + $0x70] sm:$0xff]
  %v330 = vld [vmem:[%s2 + $0x78] sm:$0xff]
  %v331 = vld [vmem:[%s2 + $0x80] sm:$0xff]
  %v332 = vld [vmem:[%s2 + $0x88] sm:$0xff]
  %v333 = vld [vmem:[%s2 + $0x90] sm:$0xff]
  %v334 = vld [vmem:[%s2 + $0x98] sm:$0xff]
  %v335 = vld [vmem:[%s2 + $0xa0] sm:$0xff]
  %v336 = vld [vmem:[%s2 + $0xa8] sm:$0xff]
  %v337 = vld [vmem:[%s2 + $0xb0] sm:$0xff]
  %v338 = vld [vmem:[%s2 + $0xb8] sm:$0xff]
  %v339 = vld [vmem:[%s2 + $0xc0] sm:$0xff]
  %v340 = vld [vmem:[%s2 + $0xc8] sm:$0xff]
  %v341 = vld [vmem:[%s2 + $0xd0] sm:$0xff]
  %v342 = vld [vmem:[%s2 + $0xd8] sm:$0xff]
  %v343 = vld [vmem:[%s2 + $0xe0] sm:$0xff]
  %v344 = vld [vmem:[%s2 + $0xe8] sm:$0xff]
  %v345 = vld [vmem:[%s2 + $0xf0] sm:$0xff]
  %v346 = vld [vmem:[%s2 + $0xf8] sm:$0xff]
  %v347 = vld [vmem:[%s3] sm:$0x1]
  %v349 = vlaneseq
  %v350 = vshrl.u32 %v349, 7
  %v351 = vsub.s32 0, %v350
  %v352 = vrot.slane %v347, %v351
  %354 = vmatprep.subr.mxu0 0.0
  %355 = vmatpush1.msra.mxu0 %v330
  %356 = vmatprep.subr.mxu0 0.0
  %357 = vmatpush1.msra.mxu0 %v329
  %358 = vmatprep.subr.mxu0 0.0
  %359 = vmatpush1.msra.mxu0 %v328
  %360 = vmatprep.subr.mxu0 0.0
  %361 = vmatpush1.msra.mxu0 %v327
  %362 = vmatprep.subr.mxu0 0.0
  %363 = vmatpush1.msra.mxu0 %v326
  %364 = vmatprep.subr.mxu0 0.0
  %365 = vmatpush1.msra.mxu0 %v325
  %366 = vmatprep.subr.mxu0 0.0
  %367 = vmatpush1.msra.mxu0 %v324
  %368 = vmatprep.subr.mxu0 0.0
  %369 = vmatpush1.msra.mxu0 %v323
  %370 = vmatprep.subr.mxu0 0.0
  %371 = vmatpush1.msra.mxu0 %v322
  %372 = vmatprep.subr.mxu0 0.0
  %373 = vmatpush1.msra.mxu0 %v321
  %374 = vmatprep.subr.mxu0 0.0
  %375 = vmatpush1.msra.mxu0 %v320
  %376 = vmatprep.subr.mxu0 0.0
  %377 = vmatpush1.msra.mxu0 %v319
  %378 = vmatprep.subr.mxu0 0.0
  %379 = vmatpush1.msra.mxu0 %v318
  %380 = vmatprep.subr.mxu0 0.0
  %381 = vmatpush1.msra.mxu0 %v317
  %382 = vmatprep.subr.mxu0 0.0
  %383 = vmatpush1.msra.mxu0 %v316
  %384 = vmatprep.subr.mxu0 0.0
  %385 = vmatpush1.msra.mxu0 %v315
  %386 = vmatprep.subr.mxu0 0.0
  %387 = vmatpush2.msra.mxu0 %v346
  %388 = vmatprep.subr.mxu0 0.0
  %389 = vmatpush2.msra.mxu0 %v345
  %390 = vmatprep.subr.mxu0 0.0
  %391 = vmatpush2.msra.mxu0 %v344
  %392 = vmatprep.subr.mxu0 0.0
  %393 = vmatpush2.msra.mxu0 %v343
  %394 = vmatprep.subr.mxu0 0.0
  %395 = vmatpush2.msra.mxu0 %v342
  %396 = vmatprep.subr.mxu0 0.0
  %397 = vmatpush2.msra.mxu0 %v341
  %398 = vmatprep.subr.mxu0 0.0
  %399 = vmatpush2.msra.mxu0 %v340
  %400 = vmatprep.subr.mxu0 0.0
  %401 = vmatpush2.msra.mxu0 %v339
  %402 = vmatprep.subr.mxu0 0.0
  %403 = vmatpush2.msra.mxu0 %v338
  %404 = vmatprep.subr.mxu0 0.0
  %405 = vmatpush2.msra.mxu0 %v337
  %406 = vmatprep.subr.mxu0 0.0
  %407 = vmatpush2.msra.mxu0 %v336
  %408 = vmatprep.subr.mxu0 0.0
  %409 = vmatpush2.msra.mxu0 %v335
  %410 = vmatprep.subr.mxu0 0.0
  %411 = vmatpush2.msra.mxu0 %v334
  %412 = vmatprep.subr.mxu0 0.0
  %413 = vmatpush2.msra.mxu0 %v333
  %414 = vmatprep.subr.mxu0 0.0
  %415 = vmatpush2.msra.mxu0 %v332
  %416 = vmatprep.subr.mxu0 0.0
  %417 = vmatpush2.msra.mxu0 %v331
  %418 = vmatprep.mubr.f32.mxu0 %v223
  %419 = vmatmul.mubr.f32.gmra.mxu0 %v314
  %v420 = vpop.f32.mrf.mxu0
  %v421 = vadd.f32 %v352, %v420
  %v422 = vpop.f32.mrf.mxu0
  %423 = vdwg.mxu0
  %v424 = vtanh.pop %v421
  %s425 = scalar_lea.vmem %s4, 8
  %426 = vst [vmem:[%s425] sm:$0xff] %v424
  %s427 = scalar_lea.vmem %s0, 16
  %v428 = vld [vmem:[%s427] sm:$0xff]
  %v429 = vld [vmem:[%s1] sm:$0xff]
  %v430 = vld [vmem:[%s1 + $0x8] sm:$0xff]
  %v431 = vld [vmem:[%s1 + $0x10] sm:$0xff]
  %v432 = vld [vmem:[%s1 + $0x18] sm:$0xff]
  %v433 = vld [vmem:[%s1 + $0x20] sm:$0xff]
  %v434 = vld [vmem:[%s1 + $0x28] sm:$0xff]
  %v435 = vld [vmem:[%s1 + $0x30] sm:$0xff]
  %v436 = vld [vmem:[%s1 + $0x38] sm:$0xff]
  %v437 = vld [vmem:[%s1 + $0x40] sm:$0xff]
  %v438 = vld [vmem:[%s1 + $0x48] sm:$0xff]
  %v439 = vld [vmem:[%s1 + $0x50] sm:$0xff]
  %v440 = vld [vmem:[%s1 + $0x58] sm:$0xff]
  %v441 = vld [vmem:[%s1 + $0x60] sm:$0xff]
  %v442 = vld [vmem:[%s1 + $0x68] sm:$0xff]
  %v443 = vld [vmem:[%s1 + $0x70] sm:$0xff]
  %v444 = vld [vmem:[%s1 + $0x78] sm:$0xff]
  %445 = vmatprep.subr.mxu0 0.0
  %446 = vmatpush1.msra.mxu0 %v444
  %447 = vmatprep.subr.mxu0 0.0
  %448 = vmatpush1.msra.mxu0 %v443
  %449 = vmatprep.subr.mxu0 0.0
  %450 = vmatpush1.msra.mxu0 %v442
  %451 = vmatprep.subr.mxu0 0.0
  %452 = vmatpush1.msra.mxu0 %v441
  %453 = vmatprep.subr.mxu0 0.0
  %454 = vmatpush1.msra.mxu0 %v440
  %455 = vmatprep.subr.mxu0 0.0
  %456 = vmatpush1.msra.mxu0 %v439
  %457 = vmatprep.subr.mxu0 0.0
  %458 = vmatpush1.msra.mxu0 %v438
  %459 = vmatprep.subr.mxu0 0.0
  %460 = vmatpush1.msra.mxu0 %v437
  %461 = vmatprep.subr.mxu0 0.0
  %462 = vmatpush1.msra.mxu0 %v436
  %463 = vmatprep.subr.mxu0 0.0
  %464 = vmatpush1.msra.mxu0 %v435
  %465 = vmatprep.subr.mxu0 0.0
  %466 = vmatpush1.msra.mxu0 %v434
  %467 = vmatprep.subr.mxu0 0.0
  %468 = vmatpush1.msra.mxu0 %v433
  %469 = vmatprep.subr.mxu0 0.0
  %470 = vmatpush1.msra.mxu0 %v432
  %471 = vmatprep.subr.mxu0 0.0
  %472 = vmatpush1.msra.mxu0 %v431
  %473 = vmatprep.subr.mxu0 0.0
  %474 = vmatpush1.msra.mxu0 %v430
  %475 = vmatprep.subr.mxu0 0.0
  %476 = vmatpush1.msra.mxu0 %v429
  %477 = vmatprep.subr.mxu0 0.0
  %478 = vmatpush2.msra.mxu0 0.0
  %479 = vmatprep.subr.mxu0 0.0
  %480 = vmatpush2.msra.mxu0 0.0
  %481 = vmatprep.subr.mxu0 0.0
  %482 = vmatpush2.msra.mxu0 0.0
  %483 = vmatprep.subr.mxu0 0.0
  %484 = vmatpush2.msra.mxu0 0.0
  %485 = vmatprep.subr.mxu0 0.0
  %486 = vmatpush2.msra.mxu0 0.0
  %487 = vmatprep.subr.mxu0 0.0
  %488 = vmatpush2.msra.mxu0 0.0
  %489 = vmatprep.subr.mxu0 0.0
  %490 = vmatpush2.msra.mxu0 0.0
  %491 = vmatprep.subr.mxu0 0.0
  %492 = vmatpush2.msra.mxu0 0.0
  %493 = vmatprep.subr.mxu0 0.0
  %494 = vmatpush2.msra.mxu0 0.0
  %495 = vmatprep.subr.mxu0 0.0
  %496 = vmatpush2.msra.mxu0 0.0
  %497 = vmatprep.subr.mxu0 0.0
  %498 = vmatpush2.msra.mxu0 0.0
  %499 = vmatprep.subr.mxu0 0.0
  %500 = vmatpush2.msra.mxu0 0.0
  %501 = vmatprep.subr.mxu0 0.0
  %502 = vmatpush2.msra.mxu0 0.0
  %503 = vmatprep.subr.mxu0 0.0
  %504 = vmatpush2.msra.mxu0 0.0
  %505 = vmatprep.subr.mxu0 0.0
  %506 = vmatpush2.msra.mxu0 0.0
  %507 = vmatprep.subr.mxu0 0.0
  %508 = vmatpush2.msra.mxu0 0.0
  %509 = vmatprep.mubr.f32.mxu0 0.0
  %510 = vmatmul.mubr.f32.gmra.mxu0 %v314
  %v511 = vpop.f32.mrf.mxu0
  %v512 = vadd.f32 0.0, %v511
  %v513 = vpop.f32.mrf.mxu0
  %514 = vdwg.mxu0
  %v515 = vadd.f32 %v428, %v512
  %v516 = vtanh.pop %v515
  %v517 = vld [vmem:[%s2] sm:$0xff]
  %v518 = vld [vmem:[%s2 + $0x8] sm:$0xff]
  %v519 = vld [vmem:[%s2 + $0x10] sm:$0xff]
  %v520 = vld [vmem:[%s2 + $0x18] sm:$0xff]
  %v521 = vld [vmem:[%s2 + $0x20] sm:$0xff]
  %v522 = vld [vmem:[%s2 + $0x28] sm:$0xff]
  %v523 = vld [vmem:[%s2 + $0x30] sm:$0xff]
  %v524 = vld [vmem:[%s2 + $0x38] sm:$0xff]
  %v525 = vld [vmem:[%s2 + $0x40] sm:$0xff]
  %v526 = vld [vmem:[%s2 + $0x48] sm:$0xff]
  %v527 = vld [vmem:[%s2 + $0x50] sm:$0xff]
  %v528 = vld [vmem:[%s2 + $0x58] sm:$0xff]
  %v529 = vld [vmem:[%s2 + $0x60] sm:$0xff]
  %v530 = vld [vmem:[%s2 + $0x68] sm:$0xff]
  %v531 = vld [vmem:[%s2 + $0x70] sm:$0xff]
  %v532 = vld [vmem:[%s2 + $0x78] sm:$0xff]
  %v533 = vld [vmem:[%s2 + $0x80] sm:$0xff]
  %v534 = vld [vmem:[%s2 + $0x88] sm:$0xff]
  %v535 = vld [vmem:[%s2 + $0x90] sm:$0xff]
  %v536 = vld [vmem:[%s2 + $0x98] sm:$0xff]
  %v537 = vld [vmem:[%s2 + $0xa0] sm:$0xff]
  %v538 = vld [vmem:[%s2 + $0xa8] sm:$0xff]
  %v539 = vld [vmem:[%s2 + $0xb0] sm:$0xff]
  %v540 = vld [vmem:[%s2 + $0xb8] sm:$0xff]
  %v541 = vld [vmem:[%s2 + $0xc0] sm:$0xff]
  %v542 = vld [vmem:[%s2 + $0xc8] sm:$0xff]
  %v543 = vld [vmem:[%s2 + $0xd0] sm:$0xff]
  %v544 = vld [vmem:[%s2 + $0xd8] sm:$0xff]
  %v545 = vld [vmem:[%s2 + $0xe0] sm:$0xff]
  %v546 = vld [vmem:[%s2 + $0xe8] sm:$0xff]
  %v547 = vld [vmem:[%s2 + $0xf0] sm:$0xff]
  %v548 = vld [vmem:[%s2 + $0xf8] sm:$0xff]
  %v549 = vld [vmem:[%s3] sm:$0x1]
  %v551 = vlaneseq
  %v552 = vshrl.u32 %v551, 7
  %v553 = vsub.s32 0, %v552
  %v554 = vrot.slane %v549, %v553
  %556 = vmatprep.subr.mxu0 0.0
  %557 = vmatpush1.msra.mxu0 %v532
  %558 = vmatprep.subr.mxu0 0.0
  %559 = vmatpush1.msra.mxu0 %v531
  %560 = vmatprep.subr.mxu0 0.0
  %561 = vmatpush1.msra.mxu0 %v530
  %562 = vmatprep.subr.mxu0 0.0
  %563 = vmatpush1.msra.mxu0 %v529
  %564 = vmatprep.subr.mxu0 0.0
  %565 = vmatpush1.msra.mxu0 %v528
  %566 = vmatprep.subr.mxu0 0.0
  %567 = vmatpush1.msra.mxu0 %v527
  %568 = vmatprep.subr.mxu0 0.0
  %569 = vmatpush1.msra.mxu0 %v526
  %570 = vmatprep.subr.mxu0 0.0
  %571 = vmatpush1.msra.mxu0 %v525
  %572 = vmatprep.subr.mxu0 0.0
  %573 = vmatpush1.msra.mxu0 %v524
  %574 = vmatprep.subr.mxu0 0.0
  %575 = vmatpush1.msra.mxu0 %v523
  %576 = vmatprep.subr.mxu0 0.0
  %577 = vmatpush1.msra.mxu0 %v522
  %578 = vmatprep.subr.mxu0 0.0
  %579 = vmatpush1.msra.mxu0 %v521
  %580 = vmatprep.subr.mxu0 0.0
  %581 = vmatpush1.msra.mxu0 %v520
  %582 = vmatprep.subr.mxu0 0.0
  %583 = vmatpush1.msra.mxu0 %v519
  %584 = vmatprep.subr.mxu0 0.0
  %585 = vmatpush1.msra.mxu0 %v518
  %586 = vmatprep.subr.mxu0 0.0
  %587 = vmatpush1.msra.mxu0 %v517
  %588 = vmatprep.subr.mxu0 0.0
  %589 = vmatpush2.msra.mxu0 %v548
  %590 = vmatprep.subr.mxu0 0.0
  %591 = vmatpush2.msra.mxu0 %v547
  %592 = vmatprep.subr.mxu0 0.0
  %593 = vmatpush2.msra.mxu0 %v546
  %594 = vmatprep.subr.mxu0 0.0
  %595 = vmatpush2.msra.mxu0 %v545
  %596 = vmatprep.subr.mxu0 0.0
  %597 = vmatpush2.msra.mxu0 %v544
  %598 = vmatprep.subr.mxu0 0.0
  %599 = vmatpush2.msra.mxu0 %v543
  %600 = vmatprep.subr.mxu0 0.0
  %601 = vmatpush2.msra.mxu0 %v542
  %602 = vmatprep.subr.mxu0 0.0
  %603 = vmatpush2.msra.mxu0 %v541
  %604 = vmatprep.subr.mxu0 0.0
  %605 = vmatpush2.msra.mxu0 %v540
  %606 = vmatprep.subr.mxu0 0.0
  %607 = vmatpush2.msra.mxu0 %v539
  %608 = vmatprep.subr.mxu0 0.0
  %609 = vmatpush2.msra.mxu0 %v538
  %610 = vmatprep.subr.mxu0 0.0
  %611 = vmatpush2.msra.mxu0 %v537
  %612 = vmatprep.subr.mxu0 0.0
  %613 = vmatpush2.msra.mxu0 %v536
  %614 = vmatprep.subr.mxu0 0.0
  %615 = vmatpush2.msra.mxu0 %v535
  %616 = vmatprep.subr.mxu0 0.0
  %617 = vmatpush2.msra.mxu0 %v534
  %618 = vmatprep.subr.mxu0 0.0
  %619 = vmatpush2.msra.mxu0 %v533
  %620 = vmatprep.mubr.f32.mxu0 %v424
  %621 = vmatmul.mubr.f32.gmra.mxu0 %v516
  %v622 = vpop.f32.mrf.mxu0
  %v623 = vadd.f32 %v554, %v622
  %v624 = vpop.f32.mrf.mxu0
  %625 = vdwg.mxu0
  %v626 = vtanh.pop %v623
  %s627 = scalar_lea.vmem %s4, 16
  %628 = vst [vmem:[%s627] sm:$0xff] %v626
  %s629 = scalar_lea.vmem %s0, 24
  %v630 = vld [vmem:[%s629] sm:$0xff]
  %v631 = vld [vmem:[%s1] sm:$0xff]
  %v632 = vld [vmem:[%s1 + $0x8] sm:$0xff]
  %v633 = vld [vmem:[%s1 + $0x10] sm:$0xff]
  %v634 = vld [vmem:[%s1 + $0x18] sm:$0xff]
  %v635 = vld [vmem:[%s1 + $0x20] sm:$0xff]
  %v636 = vld [vmem:[%s1 + $0x28] sm:$0xff]
  %v637 = vld [vmem:[%s1 + $0x30] sm:$0xff]
  %v638 = vld [vmem:[%s1 + $0x38] sm:$0xff]
  %v639 = vld [vmem:[%s1 + $0x40] sm:$0xff]
  %v640 = vld [vmem:[%s1 + $0x48] sm:$0xff]
  %v641 = vld [vmem:[%s1 + $0x50] sm:$0xff]
  %v642 = vld [vmem:[%s1 + $0x58] sm:$0xff]
  %v643 = vld [vmem:[%s1 + $0x60] sm:$0xff]
  %v644 = vld [vmem:[%s1 + $0x68] sm:$0xff]
  %v645 = vld [vmem:[%s1 + $0x70] sm:$0xff]
  %v646 = vld [vmem:[%s1 + $0x78] sm:$0xff]
  %647 = vmatprep.subr.mxu0 0.0
  %648 = vmatpush1.msra.mxu0 %v646
  %649 = vmatprep.subr.mxu0 0.0
  %650 = vmatpush1.msra.mxu0 %v645
  %651 = vmatprep.subr.mxu0 0.0
  %652 = vmatpush1.msra.mxu0 %v644
  %653 = vmatprep.subr.mxu0 0.0
  %654 = vmatpush1.msra.mxu0 %v643
  %655 = vmatprep.subr.mxu0 0.0
  %656 = vmatpush1.msra.mxu0 %v642
  %657 = vmatprep.subr.mxu0 0.0
  %658 = vmatpush1.msra.mxu0 %v641
  %659 = vmatprep.subr.mxu0 0.0
  %660 = vmatpush1.msra.mxu0 %v640
  %661 = vmatprep.subr.mxu0 0.0
  %662 = vmatpush1.msra.mxu0 %v639
  %663 = vmatprep.subr.mxu0 0.0
  %664 = vmatpush1.msra.mxu0 %v638
  %665 = vmatprep.subr.mxu0 0.0
  %666 = vmatpush1.msra.mxu0 %v637
  %667 = vmatprep.subr.mxu0 0.0
  %668 = vmatpush1.msra.mxu0 %v636
  %669 = vmatprep.subr.mxu0 0.0
  %670 = vmatpush1.msra.mxu0 %v635
  %671 = vmatprep.subr.mxu0 0.0
  %672 = vmatpush1.msra.mxu0 %v634
  %673 = vmatprep.subr.mxu0 0.0
  %674 = vmatpush1.msra.mxu0 %v633
  %675 = vmatprep.subr.mxu0 0.0
  %676 = vmatpush1.msra.mxu0 %v632
  %677 = vmatprep.subr.mxu0 0.0
  %678 = vmatpush1.msra.mxu0 %v631
  %679 = vmatprep.subr.mxu0 0.0
  %680 = vmatpush2.msra.mxu0 0.0
  %681 = vmatprep.subr.mxu0 0.0
  %682 = vmatpush2.msra.mxu0 0.0
  %683 = vmatprep.subr.mxu0 0.0
  %684 = vmatpush2.msra.mxu0 0.0
  %685 = vmatprep.subr.mxu0 0.0
  %686 = vmatpush2.msra.mxu0 0.0
  %687 = vmatprep.subr.mxu0 0.0
  %688 = vmatpush2.msra.mxu0 0.0
  %689 = vmatprep.subr.mxu0 0.0
  %690 = vmatpush2.msra.mxu0 0.0
  %691 = vmatprep.subr.mxu0 0.0
  %692 = vmatpush2.msra.mxu0 0.0
  %693 = vmatprep.subr.mxu0 0.0
  %694 = vmatpush2.msra.mxu0 0.0
  %695 = vmatprep.subr.mxu0 0.0
  %696 = vmatpush2.msra.mxu0 0.0
  %697 = vmatprep.subr.mxu0 0.0
  %698 = vmatpush2.msra.mxu0 0.0
  %699 = vmatprep.subr.mxu0 0.0
  %700 = vmatpush2.msra.mxu0 0.0
  %701 = vmatprep.subr.mxu0 0.0
  %702 = vmatpush2.msra.mxu0 0.0
  %703 = vmatprep.subr.mxu0 0.0
  %704 = vmatpush2.msra.mxu0 0.0
  %705 = vmatprep.subr.mxu0 0.0
  %706 = vmatpush2.msra.mxu0 0.0
  %707 = vmatprep.subr.mxu0 0.0
  %708 = vmatpush2.msra.mxu0 0.0
  %709 = vmatprep.subr.mxu0 0.0
  %710 = vmatpush2.msra.mxu0 0.0
  %711 = vmatprep.mubr.f32.mxu0 0.0
  %712 = vmatmul.mubr.f32.gmra.mxu0 %v516
  %v713 = vpop.f32.mrf.mxu0
  %v714 = vadd.f32 0.0, %v713
  %v715 = vpop.f32.mrf.mxu0
  %716 = vdwg.mxu0
  %v717 = vadd.f32 %v630, %v714
  %v718 = vtanh.pop %v717
  %v719 = vld [vmem:[%s2] sm:$0xff]
  %v720 = vld [vmem:[%s2 + $0x8] sm:$0xff]
  %v721 = vld [vmem:[%s2 + $0x10] sm:$0xff]
  %v722 = vld [vmem:[%s2 + $0x18] sm:$0xff]
  %v723 = vld [vmem:[%s2 + $0x20] sm:$0xff]
  %v724 = vld [vmem:[%s2 + $0x28] sm:$0xff]
  %v725 = vld [vmem:[%s2 + $0x30] sm:$0xff]
  %v726 = vld [vmem:[%s2 + $0x38] sm:$0xff]
  %v727 = vld [vmem:[%s2 + $0x40] sm:$0xff]
  %v728 = vld [vmem:[%s2 + $0x48] sm:$0xff]
  %v729 = vld [vmem:[%s2 + $0x50] sm:$0xff]
  %v730 = vld [vmem:[%s2 + $0x58] sm:$0xff]
  %v731 = vld [vmem:[%s2 + $0x60] sm:$0xff]
  %v732 = vld [vmem:[%s2 + $0x68] sm:$0xff]
  %v733 = vld [vmem:[%s2 + $0x70] sm:$0xff]
  %v734 = vld [vmem:[%s2 + $0x78] sm:$0xff]
  %v735 = vld [vmem:[%s2 + $0x80] sm:$0xff]
  %v736 = vld [vmem:[%s2 + $0x88] sm:$0xff]
  %v737 = vld [vmem:[%s2 + $0x90] sm:$0xff]
  %v738 = vld [vmem:[%s2 + $0x98] sm:$0xff]
  %v739 = vld [vmem:[%s2 + $0xa0] sm:$0xff]
  %v740 = vld [vmem:[%s2 + $0xa8] sm:$0xff]
  %v741 = vld [vmem:[%s2 + $0xb0] sm:$0xff]
  %v742 = vld [vmem:[%s2 + $0xb8] sm:$0xff]
  %v743 = vld [vmem:[%s2 + $0xc0] sm:$0xff]
  %v744 = vld [vmem:[%s2 + $0xc8] sm:$0xff]
  %v745 = vld [vmem:[%s2 + $0xd0] sm:$0xff]
  %v746 = vld [vmem:[%s2 + $0xd8] sm:$0xff]
  %v747 = vld [vmem:[%s2 + $0xe0] sm:$0xff]
  %v748 = vld [vmem:[%s2 + $0xe8] sm:$0xff]
  %v749 = vld [vmem:[%s2 + $0xf0] sm:$0xff]
  %v750 = vld [vmem:[%s2 + $0xf8] sm:$0xff]
  %v751 = vld [vmem:[%s3] sm:$0x1]
  %v753 = vlaneseq
  %v754 = vshrl.u32 %v753, 7
  %v755 = vsub.s32 0, %v754
  %v756 = vrot.slane %v751, %v755
  %758 = vmatprep.subr.mxu0 0.0
  %759 = vmatpush1.msra.mxu0 %v734
  %760 = vmatprep.subr.mxu0 0.0
  %761 = vmatpush1.msra.mxu0 %v733
  %762 = vmatprep.subr.mxu0 0.0
  %763 = vmatpush1.msra.mxu0 %v732
  %764 = vmatprep.subr.mxu0 0.0
  %765 = vmatpush1.msra.mxu0 %v731
  %766 = vmatprep.subr.mxu0 0.0
  %767 = vmatpush1.msra.mxu0 %v730
  %768 = vmatprep.subr.mxu0 0.0
  %769 = vmatpush1.msra.mxu0 %v729
  %770 = vmatprep.subr.mxu0 0.0
  %771 = vmatpush1.msra.mxu0 %v728
  %772 = vmatprep.subr.mxu0 0.0
  %773 = vmatpush1.msra.mxu0 %v727
  %774 = vmatprep.subr.mxu0 0.0
  %775 = vmatpush1.msra.mxu0 %v726
  %776 = vmatprep.subr.mxu0 0.0
  %777 = vmatpush1.msra.mxu0 %v725
  %778 = vmatprep.subr.mxu0 0.0
  %779 = vmatpush1.msra.mxu0 %v724
  %780 = vmatprep.subr.mxu0 0.0
  %781 = vmatpush1.msra.mxu0 %v723
  %782 = vmatprep.subr.mxu0 0.0
  %783 = vmatpush1.msra.mxu0 %v722
  %784 = vmatprep.subr.mxu0 0.0
  %785 = vmatpush1.msra.mxu0 %v721
  %786 = vmatprep.subr.mxu0 0.0
  %787 = vmatpush1.msra.mxu0 %v720
  %788 = vmatprep.subr.mxu0 0.0
  %789 = vmatpush1.msra.mxu0 %v719
  %790 = vmatprep.subr.mxu0 0.0
  %791 = vmatpush2.msra.mxu0 %v750
  %792 = vmatprep.subr.mxu0 0.0
  %793 = vmatpush2.msra.mxu0 %v749
  %794 = vmatprep.subr.mxu0 0.0
  %795 = vmatpush2.msra.mxu0 %v748
  %796 = vmatprep.subr.mxu0 0.0
  %797 = vmatpush2.msra.mxu0 %v747
  %798 = vmatprep.subr.mxu0 0.0
  %799 = vmatpush2.msra.mxu0 %v746
  %800 = vmatprep.subr.mxu0 0.0
  %801 = vmatpush2.msra.mxu0 %v745
  %802 = vmatprep.subr.mxu0 0.0
  %803 = vmatpush2.msra.mxu0 %v744
  %804 = vmatprep.subr.mxu0 0.0
  %805 = vmatpush2.msra.mxu0 %v743
  %806 = vmatprep.subr.mxu0 0.0
  %807 = vmatpush2.msra.mxu0 %v742
  %808 = vmatprep.subr.mxu0 0.0
  %809 = vmatpush2.msra.mxu0 %v741
  %810 = vmatprep.subr.mxu0 0.0
  %811 = vmatpush2.msra.mxu0 %v740
  %812 = vmatprep.subr.mxu0 0.0
  %813 = vmatpush2.msra.mxu0 %v739
  %814 = vmatprep.subr.mxu0 0.0
  %815 = vmatpush2.msra.mxu0 %v738
  %816 = vmatprep.subr.mxu0 0.0
  %817 = vmatpush2.msra.mxu0 %v737
  %818 = vmatprep.subr.mxu0 0.0
  %819 = vmatpush2.msra.mxu0 %v736
  %820 = vmatprep.subr.mxu0 0.0
  %821 = vmatpush2.msra.mxu0 %v735
  %822 = vmatprep.mubr.f32.mxu0 %v626
  %823 = vmatmul.mubr.f32.gmra.mxu0 %v718
  %v824 = vpop.f32.mrf.mxu0
  %v825 = vadd.f32 %v756, %v824
  %v826 = vpop.f32.mrf.mxu0
  %827 = vdwg.mxu0
  %v828 = vtanh.pop %v825
  %s829 = scalar_lea.vmem %s4, 24
  %830 = vst [vmem:[%s829] sm:$0xff] %v828
  %s831 = scalar_lea.vmem %s0, 32
  %v832 = vld [vmem:[%s831] sm:$0xff]
  %v833 = vld [vmem:[%s1] sm:$0xff]
  %v834 = vld [vmem:[%s1 + $0x8] sm:$0xff]
  %v835 = vld [vmem:[%s1 + $0x10] sm:$0xff]
  %v836 = vld [vmem:[%s1 + $0x18] sm:$0xff]
  %v837 = vld [vmem:[%s1 + $0x20] sm:$0xff]
  %v838 = vld [vmem:[%s1 + $0x28] sm:$0xff]
  %v839 = vld [vmem:[%s1 + $0x30] sm:$0xff]
  %v840 = vld [vmem:[%s1 + $0x38] sm:$0xff]
  %v841 = vld [vmem:[%s1 + $0x40] sm:$0xff]
  %v842 = vld [vmem:[%s1 + $0x48] sm:$0xff]
  %v843 = vld [vmem:[%s1 + $0x50] sm:$0xff]
  %v844 = vld [vmem:[%s1 + $0x58] sm:$0xff]
  %v845 = vld [vmem:[%s1 + $0x60] sm:$0xff]
  %v846 = vld [vmem:[%s1 + $0x68] sm:$0xff]
  %v847 = vld [vmem:[%s1 + $0x70] sm:$0xff]
  %v848 = vld [vmem:[%s1 + $0x78] sm:$0xff]
  %849 = vmatprep.subr.mxu0 0.0
  %850 = vmatpush1.msra.mxu0 %v848
  %851 = vmatprep.subr.mxu0 0.0
  %852 = vmatpush1.msra.mxu0 %v847
  %853 = vmatprep.subr.mxu0 0.0
  %854 = vmatpush1.msra.mxu0 %v846
  %855 = vmatprep.subr.mxu0 0.0
  %856 = vmatpush1.msra.mxu0 %v845
  %857 = vmatprep.subr.mxu0 0.0
  %858 = vmatpush1.msra.mxu0 %v844
  %859 = vmatprep.subr.mxu0 0.0
  %860 = vmatpush1.msra.mxu0 %v843
  %861 = vmatprep.subr.mxu0 0.0
  %862 = vmatpush1.msra.mxu0 %v842
  %863 = vmatprep.subr.mxu0 0.0
  %864 = vmatpush1.msra.mxu0 %v841
  %865 = vmatprep.subr.mxu0 0.0
  %866 = vmatpush1.msra.mxu0 %v840
  %867 = vmatprep.subr.mxu0 0.0
  %868 = vmatpush1.msra.mxu0 %v839
  %869 = vmatprep.subr.mxu0 0.0
  %870 = vmatpush1.msra.mxu0 %v838
  %871 = vmatprep.subr.mxu0 0.0
  %872 = vmatpush1.msra.mxu0 %v837
  %873 = vmatprep.subr.mxu0 0.0
  %874 = vmatpush1.msra.mxu0 %v836
  %875 = vmatprep.subr.mxu0 0.0
  %876 = vmatpush1.msra.mxu0 %v835
  %877 = vmatprep.subr.mxu0 0.0
  %878 = vmatpush1.msra.mxu0 %v834
  %879 = vmatprep.subr.mxu0 0.0
  %880 = vmatpush1.msra.mxu0 %v833
  %881 = vmatprep.subr.mxu0 0.0
  %882 = vmatpush2.msra.mxu0 0.0
  %883 = vmatprep.subr.mxu0 0.0
  %884 = vmatpush2.msra.mxu0 0.0
  %885 = vmatprep.subr.mxu0 0.0
  %886 = vmatpush2.msra.mxu0 0.0
  %887 = vmatprep.subr.mxu0 0.0
  %888 = vmatpush2.msra.mxu0 0.0
  %889 = vmatprep.subr.mxu0 0.0
  %890 = vmatpush2.msra.mxu0 0.0
  %891 = vmatprep.subr.mxu0 0.0
  %892 = vmatpush2.msra.mxu0 0.0
  %893 = vmatprep.subr.mxu0 0.0
  %894 = vmatpush2.msra.mxu0 0.0
  %895 = vmatprep.subr.mxu0 0.0
  %896 = vmatpush2.msra.mxu0 0.0
  %897 = vmatprep.subr.mxu0 0.0
  %898 = vmatpush2.msra.mxu0 0.0
  %899 = vmatprep.subr.mxu0 0.0
  %900 = vmatpush2.msra.mxu0 0.0
  %901 = vmatprep.subr.mxu0 0.0
  %902 = vmatpush2.msra.mxu0 0.0
  %903 = vmatprep.subr.mxu0 0.0
  %904 = vmatpush2.msra.mxu0 0.0
  %905 = vmatprep.subr.mxu0 0.0
  %906 = vmatpush2.msra.mxu0 0.0
  %907 = vmatprep.subr.mxu0 0.0
  %908 = vmatpush2.msra.mxu0 0.0
  %909 = vmatprep.subr.mxu0 0.0
  %910 = vmatpush2.msra.mxu0 0.0
  %911 = vmatprep.subr.mxu0 0.0
  %912 = vmatpush2.msra.mxu0 0.0
  %913 = vmatprep.mubr.f32.mxu0 0.0
  %914 = vmatmul.mubr.f32.gmra.mxu0 %v718
  %v915 = vpop.f32.mrf.mxu0
  %v916 = vadd.f32 0.0, %v915
  %v917 = vpop.f32.mrf.mxu0
  %918 = vdwg.mxu0
  %v919 = vadd.f32 %v832, %v916
  %v920 = vtanh.pop %v919
  %v921 = vld [vmem:[%s2] sm:$0xff]
  %v922 = vld [vmem:[%s2 + $0x8] sm:$0xff]
  %v923 = vld [vmem:[%s2 + $0x10] sm:$0xff]
  %v924 = vld [vmem:[%s2 + $0x18] sm:$0xff]
  %v925 = vld [vmem:[%s2 + $0x20] sm:$0xff]
  %v926 = vld [vmem:[%s2 + $0x28] sm:$0xff]
  %v927 = vld [vmem:[%s2 + $0x30] sm:$0xff]
  %v928 = vld [vmem:[%s2 + $0x38] sm:$0xff]
  %v929 = vld [vmem:[%s2 + $0x40] sm:$0xff]
  %v930 = vld [vmem:[%s2 + $0x48] sm:$0xff]
  %v931 = vld [vmem:[%s2 + $0x50] sm:$0xff]
  %v932 = vld [vmem:[%s2 + $0x58] sm:$0xff]
  %v933 = vld [vmem:[%s2 + $0x60] sm:$0xff]
  %v934 = vld [vmem:[%s2 + $0x68] sm:$0xff]
  %v935 = vld [vmem:[%s2 + $0x70] sm:$0xff]
  %v936 = vld [vmem:[%s2 + $0x78] sm:$0xff]
  %v937 = vld [vmem:[%s2 + $0x80] sm:$0xff]
  %v938 = vld [vmem:[%s2 + $0x88] sm:$0xff]
  %v939 = vld [vmem:[%s2 + $0x90] sm:$0xff]
  %v940 = vld [vmem:[%s2 + $0x98] sm:$0xff]
  %v941 = vld [vmem:[%s2 + $0xa0] sm:$0xff]
  %v942 = vld [vmem:[%s2 + $0xa8] sm:$0xff]
  %v943 = vld [vmem:[%s2 + $0xb0] sm:$0xff]
  %v944 = vld [vmem:[%s2 + $0xb8] sm:$0xff]
  %v945 = vld [vmem:[%s2 + $0xc0] sm:$0xff]
  %v946 = vld [vmem:[%s2 + $0xc8] sm:$0xff]
  %v947 = vld [vmem:[%s2 + $0xd0] sm:$0xff]
  %v948 = vld [vmem:[%s2 + $0xd8] sm:$0xff]
  %v949 = vld [vmem:[%s2 + $0xe0] sm:$0xff]
  %v950 = vld [vmem:[%s2 + $0xe8] sm:$0xff]
  %v951 = vld [vmem:[%s2 + $0xf0] sm:$0xff]
  %v952 = vld [vmem:[%s2 + $0xf8] sm:$0xff]
  %v953 = vld [vmem:[%s3] sm:$0x1]
  %v955 = vlaneseq
  %v956 = vshrl.u32 %v955, 7
  %v957 = vsub.s32 0, %v956
  %v958 = vrot.slane %v953, %v957
  %960 = vmatprep.subr.mxu0 0.0
  %961 = vmatpush1.msra.mxu0 %v936
  %962 = vmatprep.subr.mxu0 0.0
  %963 = vmatpush1.msra.mxu0 %v935
  %964 = vmatprep.subr.mxu0 0.0
  %965 = vmatpush1.msra.mxu0 %v934
  %966 = vmatprep.subr.mxu0 0.0
  %967 = vmatpush1.msra.mxu0 %v933
  %968 = vmatprep.subr.mxu0 0.0
  %969 = vmatpush1.msra.mxu0 %v932
  %970 = vmatprep.subr.mxu0 0.0
  %971 = vmatpush1.msra.mxu0 %v931
  %972 = vmatprep.subr.mxu0 0.0
  %973 = vmatpush1.msra.mxu0 %v930
  %974 = vmatprep.subr.mxu0 0.0
  %975 = vmatpush1.msra.mxu0 %v929
  %976 = vmatprep.subr.mxu0 0.0
  %977 = vmatpush1.msra.mxu0 %v928
  %978 = vmatprep.subr.mxu0 0.0
  %979 = vmatpush1.msra.mxu0 %v927
  %980 = vmatprep.subr.mxu0 0.0
  %981 = vmatpush1.msra.mxu0 %v926
  %982 = vmatprep.subr.mxu0 0.0
  %983 = vmatpush1.msra.mxu0 %v925
  %984 = vmatprep.subr.mxu0 0.0
  %985 = vmatpush1.msra.mxu0 %v924
  %986 = vmatprep.subr.mxu0 0.0
  %987 = vmatpush1.msra.mxu0 %v923
  %988 = vmatprep.subr.mxu0 0.0
  %989 = vmatpush1.msra.mxu0 %v922
  %990 = vmatprep.subr.mxu0 0.0
  %991 = vmatpush1.msra.mxu0 %v921
  %992 = vmatprep.subr.mxu0 0.0
  %993 = vmatpush2.msra.mxu0 %v952
  %994 = vmatprep.subr.mxu0 0.0
  %995 = vmatpush2.msra.mxu0 %v951
  %996 = vmatprep.subr.mxu0 0.0
  %997 = vmatpush2.msra.mxu0 %v950
  %998 = vmatprep.subr.mxu0 0.0
  %999 = vmatpush2.msra.mxu0 %v949
  %1000 = vmatprep.subr.mxu0 0.0
  %1001 = vmatpush2.msra.mxu0 %v948
  %1002 = vmatprep.subr.mxu0 0.0
  %1003 = vmatpush2.msra.mxu0 %v947
  %1004 = vmatprep.subr.mxu0 0.0
  %1005 = vmatpush2.msra.mxu0 %v946
  %1006 = vmatprep.subr.mxu0 0.0
  %1007 = vmatpush2.msra.mxu0 %v945
  %1008 = vmatprep.subr.mxu0 0.0
  %1009 = vmatpush2.msra.mxu0 %v944
  %1010 = vmatprep.subr.mxu0 0.0
  %1011 = vmatpush2.msra.mxu0 %v943
  %1012 = vmatprep.subr.mxu0 0.0
  %1013 = vmatpush2.msra.mxu0 %v942
  %1014 = vmatprep.subr.mxu0 0.0
  %1015 = vmatpush2.msra.mxu0 %v941
  %1016 = vmatprep.subr.mxu0 0.0
  %1017 = vmatpush2.msra.mxu0 %v940
  %1018 = vmatprep.subr.mxu0 0.0
  %1019 = vmatpush2.msra.mxu0 %v939
  %1020 = vmatprep.subr.mxu0 0.0
  %1021 = vmatpush2.msra.mxu0 %v938
  %1022 = vmatprep.subr.mxu0 0.0
  %1023 = vmatpush2.msra.mxu0 %v937
  %1024 = vmatprep.mubr.f32.mxu0 %v828
  %1025 = vmatmul.mubr.f32.gmra.mxu0 %v920
  %v1026 = vpop.f32.mrf.mxu0
  %v1027 = vadd.f32 %v958, %v1026
  %v1028 = vpop.f32.mrf.mxu0
  %1029 = vdwg.mxu0
  %v1030 = vtanh.pop %v1027
  %s1031 = scalar_lea.vmem %s4, 32
  %1032 = vst [vmem:[%s1031] sm:$0xff] %v1030
  %s1033 = scalar_lea.vmem %s0, 40
  %v1034 = vld [vmem:[%s1033] sm:$0xff]
  %v1035 = vld [vmem:[%s1] sm:$0xff]
  %v1036 = vld [vmem:[%s1 + $0x8] sm:$0xff]
  %v1037 = vld [vmem:[%s1 + $0x10] sm:$0xff]
  %v1038 = vld [vmem:[%s1 + $0x18] sm:$0xff]
  %v1039 = vld [vmem:[%s1 + $0x20] sm:$0xff]
  %v1040 = vld [vmem:[%s1 + $0x28] sm:$0xff]
  %v1041 = vld [vmem:[%s1 + $0x30] sm:$0xff]
  %v1042 = vld [vmem:[%s1 + $0x38] sm:$0xff]
  %v1043 = vld [vmem:[%s1 + $0x40] sm:$0xff]
  %v1044 = vld [vmem:[%s1 + $0x48] sm:$0xff]
  %v1045 = vld [vmem:[%s1 + $0x50] sm:$0xff]
  %v1046 = vld [vmem:[%s1 + $0x58] sm:$0xff]
  %v1047 = vld [vmem:[%s1 + $0x60] sm:$0xff]
  %v1048 = vld [vmem:[%s1 + $0x68] sm:$0xff]
  %v1049 = vld [vmem:[%s1 + $0x70] sm:$0xff]
  %v1050 = vld [vmem:[%s1 + $0x78] sm:$0xff]
  %1051 = vmatprep.subr.mxu0 0.0
  %1052 = vmatpush1.msra.mxu0 %v1050
  %1053 = vmatprep.subr.mxu0 0.0
  %1054 = vmatpush1.msra.mxu0 %v1049
  %1055 = vmatprep.subr.mxu0 0.0
  %1056 = vmatpush1.msra.mxu0 %v1048
  %1057 = vmatprep.subr.mxu0 0.0
  %1058 = vmatpush1.msra.mxu0 %v1047
  %1059 = vmatprep.subr.mxu0 0.0
  %1060 = vmatpush1.msra.mxu0 %v1046
  %1061 = vmatprep.subr.mxu0 0.0
  %1062 = vmatpush1.msra.mxu0 %v1045
  %1063 = vmatprep.subr.mxu0 0.0
  %1064 = vmatpush1.msra.mxu0 %v1044
  %1065 = vmatprep.subr.mxu0 0.0
  %1066 = vmatpush1.msra.mxu0 %v1043
  %1067 = vmatprep.subr.mxu0 0.0
  %1068 = vmatpush1.msra.mxu0 %v1042
  %1069 = vmatprep.subr.mxu0 0.0
  %1070 = vmatpush1.msra.mxu0 %v1041
  %1071 = vmatprep.subr.mxu0 0.0
  %1072 = vmatpush1.msra.mxu0 %v1040
  %1073 = vmatprep.subr.mxu0 0.0
  %1074 = vmatpush1.msra.mxu0 %v1039
  %1075 = vmatprep.subr.mxu0 0.0
  %1076 = vmatpush1.msra.mxu0 %v1038
  %1077 = vmatprep.subr.mxu0 0.0
  %1078 = vmatpush1.msra.mxu0 %v1037
  %1079 = vmatprep.subr.mxu0 0.0
  %1080 = vmatpush1.msra.mxu0 %v1036
  %1081 = vmatprep.subr.mxu0 0.0
  %1082 = vmatpush1.msra.mxu0 %v1035
  %1083 = vmatprep.subr.mxu0 0.0
  %1084 = vmatpush2.msra.mxu0 0.0
  %1085 = vmatprep.subr.mxu0 0.0
  %1086 = vmatpush2.msra.mxu0 0.0
  %1087 = vmatprep.subr.mxu0 0.0
  %1088 = vmatpush2.msra.mxu0 0.0
  %1089 = vmatprep.subr.mxu0 0.0
  %1090 = vmatpush2.msra.mxu0 0.0
  %1091 = vmatprep.subr.mxu0 0.0
  %1092 = vmatpush2.msra.mxu0 0.0
  %1093 = vmatprep.subr.mxu0 0.0
  %1094 = vmatpush2.msra.mxu0 0.0
  %1095 = vmatprep.subr.mxu0 0.0
  %1096 = vmatpush2.msra.mxu0 0.0
  %1097 = vmatprep.subr.mxu0 0.0
  %1098 = vmatpush2.msra.mxu0 0.0
  %1099 = vmatprep.subr.mxu0 0.0
  %1100 = vmatpush2.msra.mxu0 0.0
  %1101 = vmatprep.subr.mxu0 0.0
  %1102 = vmatpush2.msra.mxu0 0.0
  %1103 = vmatprep.subr.mxu0 0.0
  %1104 = vmatpush2.msra.mxu0 0.0
  %1105 = vmatprep.subr.mxu0 0.0
  %1106 = vmatpush2.msra.mxu0 0.0
  %1107 = vmatprep.subr.mxu0 0.0
  %1108 = vmatpush2.msra.mxu0 0.0
  %1109 = vmatprep.subr.mxu0 0.0
  %1110 = vmatpush2.msra.mxu0 0.0
  %1111 = vmatprep.subr.mxu0 0.0
  %1112 = vmatpush2.msra.mxu0 0.0
  %1113 = vmatprep.subr.mxu0 0.0
  %1114 = vmatpush2.msra.mxu0 0.0
  %1115 = vmatprep.mubr.f32.mxu0 0.0
  %1116 = vmatmul.mubr.f32.gmra.mxu0 %v920
  %v1117 = vpop.f32.mrf.mxu0
  %v1118 = vadd.f32 0.0, %v1117
  %v1119 = vpop.f32.mrf.mxu0
  %1120 = vdwg.mxu0
  %v1121 = vadd.f32 %v1034, %v1118
  %v1122 = vtanh.pop %v1121
  %v1123 = vld [vmem:[%s2] sm:$0xff]
  %v1124 = vld [vmem:[%s2 + $0x8] sm:$0xff]
  %v1125 = vld [vmem:[%s2 + $0x10] sm:$0xff]
  %v1126 = vld [vmem:[%s2 + $0x18] sm:$0xff]
  %v1127 = vld [vmem:[%s2 + $0x20] sm:$0xff]
  %v1128 = vld [vmem:[%s2 + $0x28] sm:$0xff]
  %v1129 = vld [vmem:[%s2 + $0x30] sm:$0xff]
  %v1130 = vld [vmem:[%s2 + $0x38] sm:$0xff]
  %v1131 = vld [vmem:[%s2 + $0x40] sm:$0xff]
  %v1132 = vld [vmem:[%s2 + $0x48] sm:$0xff]
  %v1133 = vld [vmem:[%s2 + $0x50] sm:$0xff]
  %v1134 = vld [vmem:[%s2 + $0x58] sm:$0xff]
  %v1135 = vld [vmem:[%s2 + $0x60] sm:$0xff]
  %v1136 = vld [vmem:[%s2 + $0x68] sm:$0xff]
  %v1137 = vld [vmem:[%s2 + $0x70] sm:$0xff]
  %v1138 = vld [vmem:[%s2 + $0x78] sm:$0xff]
  %v1139 = vld [vmem:[%s2 + $0x80] sm:$0xff]
  %v1140 = vld [vmem:[%s2 + $0x88] sm:$0xff]
  %v1141 = vld [vmem:[%s2 + $0x90] sm:$0xff]
  %v1142 = vld [vmem:[%s2 + $0x98] sm:$0xff]
  %v1143 = vld [vmem:[%s2 + $0xa0] sm:$0xff]
  %v1144 = vld [vmem:[%s2 + $0xa8] sm:$0xff]
  %v1145 = vld [vmem:[%s2 + $0xb0] sm:$0xff]
  %v1146 = vld [vmem:[%s2 + $0xb8] sm:$0xff]
  %v1147 = vld [vmem:[%s2 + $0xc0] sm:$0xff]
  %v1148 = vld [vmem:[%s2 + $0xc8] sm:$0xff]
  %v1149 = vld [vmem:[%s2 + $0xd0] sm:$0xff]
  %v1150 = vld [vmem:[%s2 + $0xd8] sm:$0xff]
  %v1151 = vld [vmem:[%s2 + $0xe0] sm:$0xff]
  %v1152 = vld [vmem:[%s2 + $0xe8] sm:$0xff]
  %v1153 = vld [vmem:[%s2 + $0xf0] sm:$0xff]
  %v1154 = vld [vmem:[%s2 + $0xf8] sm:$0xff]
  %v1155 = vld [vmem:[%s3] sm:$0x1]
  %v1157 = vlaneseq
  %v1158 = vshrl.u32 %v1157, 7
  %v1159 = vsub.s32 0, %v1158
  %v1160 = vrot.slane %v1155, %v1159
  %1162 = vmatprep.subr.mxu0 0.0
  %1163 = vmatpush1.msra.mxu0 %v1138
  %1164 = vmatprep.subr.mxu0 0.0
  %1165 = vmatpush1.msra.mxu0 %v1137
  %1166 = vmatprep.subr.mxu0 0.0
  %1167 = vmatpush1.msra.mxu0 %v1136
  %1168 = vmatprep.subr.mxu0 0.0
  %1169 = vmatpush1.msra.mxu0 %v1135
  %1170 = vmatprep.subr.mxu0 0.0
  %1171 = vmatpush1.msra.mxu0 %v1134
  %1172 = vmatprep.subr.mxu0 0.0
  %1173 = vmatpush1.msra.mxu0 %v1133
  %1174 = vmatprep.subr.mxu0 0.0
  %1175 = vmatpush1.msra.mxu0 %v1132
  %1176 = vmatprep.subr.mxu0 0.0
  %1177 = vmatpush1.msra.mxu0 %v1131
  %1178 = vmatprep.subr.mxu0 0.0
  %1179 = vmatpush1.msra.mxu0 %v1130
  %1180 = vmatprep.subr.mxu0 0.0
  %1181 = vmatpush1.msra.mxu0 %v1129
  %1182 = vmatprep.subr.mxu0 0.0
  %1183 = vmatpush1.msra.mxu0 %v1128
  %1184 = vmatprep.subr.mxu0 0.0
  %1185 = vmatpush1.msra.mxu0 %v1127
  %1186 = vmatprep.subr.mxu0 0.0
  %1187 = vmatpush1.msra.mxu0 %v1126
  %1188 = vmatprep.subr.mxu0 0.0
  %1189 = vmatpush1.msra.mxu0 %v1125
  %1190 = vmatprep.subr.mxu0 0.0
  %1191 = vmatpush1.msra.mxu0 %v1124
  %1192 = vmatprep.subr.mxu0 0.0
  %1193 = vmatpush1.msra.mxu0 %v1123
  %1194 = vmatprep.subr.mxu0 0.0
  %1195 = vmatpush2.msra.mxu0 %v1154
  %1196 = vmatprep.subr.mxu0 0.0
  %1197 = vmatpush2.msra.mxu0 %v1153
  %1198 = vmatprep.subr.mxu0 0.0
  %1199 = vmatpush2.msra.mxu0 %v1152
  %1200 = vmatprep.subr.mxu0 0.0
  %1201 = vmatpush2.msra.mxu0 %v1151
  %1202 = vmatprep.subr.mxu0 0.0
  %1203 = vmatpush2.msra.mxu0 %v1150
  %1204 = vmatprep.subr.mxu0 0.0
  %1205 = vmatpush2.msra.mxu0 %v1149
  %1206 = vmatprep.subr.mxu0 0.0
  %1207 = vmatpush2.msra.mxu0 %v1148
  %1208 = vmatprep.subr.mxu0 0.0
  %1209 = vmatpush2.msra.mxu0 %v1147
  %1210 = vmatprep.subr.mxu0 0.0
  %1211 = vmatpush2.msra.mxu0 %v1146
  %1212 = vmatprep.subr.mxu0 0.0
  %1213 = vmatpush2.msra.mxu0 %v1145
  %1214 = vmatprep.subr.mxu0 0.0
  %1215 = vmatpush2.msra.mxu0 %v1144
  %1216 = vmatprep.subr.mxu0 0.0
  %1217 = vmatpush2.msra.mxu0 %v1143
  %1218 = vmatprep.subr.mxu0 0.0
  %1219 = vmatpush2.msra.mxu0 %v1142
  %1220 = vmatprep.subr.mxu0 0.0
  %1221 = vmatpush2.msra.mxu0 %v1141
  %1222 = vmatprep.subr.mxu0 0.0
  %1223 = vmatpush2.msra.mxu0 %v1140
  %1224 = vmatprep.subr.mxu0 0.0
  %1225 = vmatpush2.msra.mxu0 %v1139
  %1226 = vmatprep.mubr.f32.mxu0 %v1030
  %1227 = vmatmul.mubr.f32.gmra.mxu0 %v1122
  %v1228 = vpop.f32.mrf.mxu0
  %v1229 = vadd.f32 %v1160, %v1228
  %v1230 = vpop.f32.mrf.mxu0
  %1231 = vdwg.mxu0
  %v1232 = vtanh.pop %v1229
  %s1233 = scalar_lea.vmem %s4, 40
  %1234 = vst [vmem:[%s1233] sm:$0xff] %v1232
  %s1235 = scalar_lea.vmem %s0, 48
  %v1236 = vld [vmem:[%s1235] sm:$0xff]
  %v1237 = vld [vmem:[%s1] sm:$0xff]
  %v1238 = vld [vmem:[%s1 + $0x8] sm:$0xff]
  %v1239 = vld [vmem:[%s1 + $0x10] sm:$0xff]
  %v1240 = vld [vmem:[%s1 + $0x18] sm:$0xff]
  %v1241 = vld [vmem:[%s1 + $0x20] sm:$0xff]
  %v1242 = vld [vmem:[%s1 + $0x28] sm:$0xff]
  %v1243 = vld [vmem:[%s1 + $0x30] sm:$0xff]
  %v1244 = vld [vmem:[%s1 + $0x38] sm:$0xff]
  %v1245 = vld [vmem:[%s1 + $0x40] sm:$0xff]
  %v1246 = vld [vmem:[%s1 + $0x48] sm:$0xff]
  %v1247 = vld [vmem:[%s1 + $0x50] sm:$0xff]
  %v1248 = vld [vmem:[%s1 + $0x58] sm:$0xff]
  %v1249 = vld [vmem:[%s1 + $0x60] sm:$0xff]
  %v1250 = vld [vmem:[%s1 + $0x68] sm:$0xff]
  %v1251 = vld [vmem:[%s1 + $0x70] sm:$0xff]
  %v1252 = vld [vmem:[%s1 + $0x78] sm:$0xff]
  %1253 = vmatprep.subr.mxu0 0.0
  %1254 = vmatpush1.msra.mxu0 %v1252
  %1255 = vmatprep.subr.mxu0 0.0
  %1256 = vmatpush1.msra.mxu0 %v1251
  %1257 = vmatprep.subr.mxu0 0.0
  %1258 = vmatpush1.msra.mxu0 %v1250
  %1259 = vmatprep.subr.mxu0 0.0
  %1260 = vmatpush1.msra.mxu0 %v1249
  %1261 = vmatprep.subr.mxu0 0.0
  %1262 = vmatpush1.msra.mxu0 %v1248
  %1263 = vmatprep.subr.mxu0 0.0
  %1264 = vmatpush1.msra.mxu0 %v1247
  %1265 = vmatprep.subr.mxu0 0.0
  %1266 = vmatpush1.msra.mxu0 %v1246
  %1267 = vmatprep.subr.mxu0 0.0
  %1268 = vmatpush1.msra.mxu0 %v1245
  %1269 = vmatprep.subr.mxu0 0.0
  %1270 = vmatpush1.msra.mxu0 %v1244
  %1271 = vmatprep.subr.mxu0 0.0
  %1272 = vmatpush1.msra.mxu0 %v1243
  %1273 = vmatprep.subr.mxu0 0.0
  %1274 = vmatpush1.msra.mxu0 %v1242
  %1275 = vmatprep.subr.mxu0 0.0
  %1276 = vmatpush1.msra.mxu0 %v1241
  %1277 = vmatprep.subr.mxu0 0.0
  %1278 = vmatpush1.msra.mxu0 %v1240
  %1279 = vmatprep.subr.mxu0 0.0
  %1280 = vmatpush1.msra.mxu0 %v1239
  %1281 = vmatprep.subr.mxu0 0.0
  %1282 = vmatpush1.msra.mxu0 %v1238
  %1283 = vmatprep.subr.mxu0 0.0
  %1284 = vmatpush1.msra.mxu0 %v1237
  %1285 = vmatprep.subr.mxu0 0.0
  %1286 = vmatpush2.msra.mxu0 0.0
  %1287 = vmatprep.subr.mxu0 0.0
  %1288 = vmatpush2.msra.mxu0 0.0
  %1289 = vmatprep.subr.mxu0 0.0
  %1290 = vmatpush2.msra.mxu0 0.0
  %1291 = vmatprep.subr.mxu0 0.0
  %1292 = vmatpush2.msra.mxu0 0.0
  %1293 = vmatprep.subr.mxu0 0.0
  %1294 = vmatpush2.msra.mxu0 0.0
  %1295 = vmatprep.subr.mxu0 0.0
  %1296 = vmatpush2.msra.mxu0 0.0
  %1297 = vmatprep.subr.mxu0 0.0
  %1298 = vmatpush2.msra.mxu0 0.0
  %1299 = vmatprep.subr.mxu0 0.0
  %1300 = vmatpush2.msra.mxu0 0.0
  %1301 = vmatprep.subr.mxu0 0.0
  %1302 = vmatpush2.msra.mxu0 0.0
  %1303 = vmatprep.subr.mxu0 0.0
  %1304 = vmatpush2.msra.mxu0 0.0
  %1305 = vmatprep.subr.mxu0 0.0
  %1306 = vmatpush2.msra.mxu0 0.0
  %1307 = vmatprep.subr.mxu0 0.0
  %1308 = vmatpush2.msra.mxu0 0.0
  %1309 = vmatprep.subr.mxu0 0.0
  %1310 = vmatpush2.msra.mxu0 0.0
  %1311 = vmatprep.subr.mxu0 0.0
  %1312 = vmatpush2.msra.mxu0 0.0
  %1313 = vmatprep.subr.mxu0 0.0
  %1314 = vmatpush2.msra.mxu0 0.0
  %1315 = vmatprep.subr.mxu0 0.0
  %1316 = vmatpush2.msra.mxu0 0.0
  %1317 = vmatprep.mubr.f32.mxu0 0.0
  %1318 = vmatmul.mubr.f32.gmra.mxu0 %v1122
  %v1319 = vpop.f32.mrf.mxu0
  %v1320 = vadd.f32 0.0, %v1319
  %v1321 = vpop.f32.mrf.mxu0
  %1322 = vdwg.mxu0
  %v1323 = vadd.f32 %v1236, %v1320
  %v1324 = vtanh.pop %v1323
  %v1325 = vld [vmem:[%s2] sm:$0xff]
  %v1326 = vld [vmem:[%s2 + $0x8] sm:$0xff]
  %v1327 = vld [vmem:[%s2 + $0x10] sm:$0xff]
  %v1328 = vld [vmem:[%s2 + $0x18] sm:$0xff]
  %v1329 = vld [vmem:[%s2 + $0x20] sm:$0xff]
  %v1330 = vld [vmem:[%s2 + $0x28] sm:$0xff]
  %v1331 = vld [vmem:[%s2 + $0x30] sm:$0xff]
  %v1332 = vld [vmem:[%s2 + $0x38] sm:$0xff]
  %v1333 = vld [vmem:[%s2 + $0x40] sm:$0xff]
  %v1334 = vld [vmem:[%s2 + $0x48] sm:$0xff]
  %v1335 = vld [vmem:[%s2 + $0x50] sm:$0xff]
  %v1336 = vld [vmem:[%s2 + $0x58] sm:$0xff]
  %v1337 = vld [vmem:[%s2 + $0x60] sm:$0xff]
  %v1338 = vld [vmem:[%s2 + $0x68] sm:$0xff]
  %v1339 = vld [vmem:[%s2 + $0x70] sm:$0xff]
  %v1340 = vld [vmem:[%s2 + $0x78] sm:$0xff]
  %v1341 = vld [vmem:[%s2 + $0x80] sm:$0xff]
  %v1342 = vld [vmem:[%s2 + $0x88] sm:$0xff]
  %v1343 = vld [vmem:[%s2 + $0x90] sm:$0xff]
  %v1344 = vld [vmem:[%s2 + $0x98] sm:$0xff]
  %v1345 = vld [vmem:[%s2 + $0xa0] sm:$0xff]
  %v1346 = vld [vmem:[%s2 + $0xa8] sm:$0xff]
  %v1347 = vld [vmem:[%s2 + $0xb0] sm:$0xff]
  %v1348 = vld [vmem:[%s2 + $0xb8] sm:$0xff]
  %v1349 = vld [vmem:[%s2 + $0xc0] sm:$0xff]
  %v1350 = vld [vmem:[%s2 + $0xc8] sm:$0xff]
  %v1351 = vld [vmem:[%s2 + $0xd0] sm:$0xff]
  %v1352 = vld [vmem:[%s2 + $0xd8] sm:$0xff]
  %v1353 = vld [vmem:[%s2 + $0xe0] sm:$0xff]
  %v1354 = vld [vmem:[%s2 + $0xe8] sm:$0xff]
  %v1355 = vld [vmem:[%s2 + $0xf0] sm:$0xff]
  %v1356 = vld [vmem:[%s2 + $0xf8] sm:$0xff]
  %v1357 = vld [vmem:[%s3] sm:$0x1]
  %v1359 = vlaneseq
  %v1360 = vshrl.u32 %v1359, 7
  %v1361 = vsub.s32 0, %v1360
  %v1362 = vrot.slane %v1357, %v1361
  %1364 = vmatprep.subr.mxu0 0.0
  %1365 = vmatpush1.msra.mxu0 %v1340
  %1366 = vmatprep.subr.mxu0 0.0
  %1367 = vmatpush1.msra.mxu0 %v1339
  %1368 = vmatprep.subr.mxu0 0.0
  %1369 = vmatpush1.msra.mxu0 %v1338
  %1370 = vmatprep.subr.mxu0 0.0
  %1371 = vmatpush1.msra.mxu0 %v1337
  %1372 = vmatprep.subr.mxu0 0.0
  %1373 = vmatpush1.msra.mxu0 %v1336
  %1374 = vmatprep.subr.mxu0 0.0
  %1375 = vmatpush1.msra.mxu0 %v1335
  %1376 = vmatprep.subr.mxu0 0.0
  %1377 = vmatpush1.msra.mxu0 %v1334
  %1378 = vmatprep.subr.mxu0 0.0
  %1379 = vmatpush1.msra.mxu0 %v1333
  %1380 = vmatprep.subr.mxu0 0.0
  %1381 = vmatpush1.msra.mxu0 %v1332
  %1382 = vmatprep.subr.mxu0 0.0
  %1383 = vmatpush1.msra.mxu0 %v1331
  %1384 = vmatprep.subr.mxu0 0.0
  %1385 = vmatpush1.msra.mxu0 %v1330
  %1386 = vmatprep.subr.mxu0 0.0
  %1387 = vmatpush1.msra.mxu0 %v1329
  %1388 = vmatprep.subr.mxu0 0.0
  %1389 = vmatpush1.msra.mxu0 %v1328
  %1390 = vmatprep.subr.mxu0 0.0
  %1391 = vmatpush1.msra.mxu0 %v1327
  %1392 = vmatprep.subr.mxu0 0.0
  %1393 = vmatpush1.msra.mxu0 %v1326
  %1394 = vmatprep.subr.mxu0 0.0
  %1395 = vmatpush1.msra.mxu0 %v1325
  %1396 = vmatprep.subr.mxu0 0.0
  %1397 = vmatpush2.msra.mxu0 %v1356
  %1398 = vmatprep.subr.mxu0 0.0
  %1399 = vmatpush2.msra.mxu0 %v1355
  %1400 = vmatprep.subr.mxu0 0.0
  %1401 = vmatpush2.msra.mxu0 %v1354
  %1402 = vmatprep.subr.mxu0 0.0
  %1403 = vmatpush2.msra.mxu0 %v1353
  %1404 = vmatprep.subr.mxu0 0.0
  %1405 = vmatpush2.msra.mxu0 %v1352
  %1406 = vmatprep.subr.mxu0 0.0
  %1407 = vmatpush2.msra.mxu0 %v1351
  %1408 = vmatprep.subr.mxu0 0.0
  %1409 = vmatpush2.msra.mxu0 %v1350
  %1410 = vmatprep.subr.mxu0 0.0
  %1411 = vmatpush2.msra.mxu0 %v1349
  %1412 = vmatprep.subr.mxu0 0.0
  %1413 = vmatpush2.msra.mxu0 %v1348
  %1414 = vmatprep.subr.mxu0 0.0
  %1415 = vmatpush2.msra.mxu0 %v1347
  %1416 = vmatprep.subr.mxu0 0.0
  %1417 = vmatpush2.msra.mxu0 %v1346
  %1418 = vmatprep.subr.mxu0 0.0
  %1419 = vmatpush2.msra.mxu0 %v1345
  %1420 = vmatprep.subr.mxu0 0.0
  %1421 = vmatpush2.msra.mxu0 %v1344
  %1422 = vmatprep.subr.mxu0 0.0
  %1423 = vmatpush2.msra.mxu0 %v1343
  %1424 = vmatprep.subr.mxu0 0.0
  %1425 = vmatpush2.msra.mxu0 %v1342
  %1426 = vmatprep.subr.mxu0 0.0
  %1427 = vmatpush2.msra.mxu0 %v1341
  %1428 = vmatprep.mubr.f32.mxu0 %v1232
  %1429 = vmatmul.mubr.f32.gmra.mxu0 %v1324
  %v1430 = vpop.f32.mrf.mxu0
  %v1431 = vadd.f32 %v1362, %v1430
  %v1432 = vpop.f32.mrf.mxu0
  %1433 = vdwg.mxu0
  %v1434 = vtanh.pop %v1431
  %s1435 = scalar_lea.vmem %s4, 48
  %1436 = vst [vmem:[%s1435] sm:$0xff] %v1434
  %s1437 = scalar_lea.vmem %s0, 56
  %v1438 = vld [vmem:[%s1437] sm:$0xff]
  %v1439 = vld [vmem:[%s1] sm:$0xff]
  %v1440 = vld [vmem:[%s1 + $0x8] sm:$0xff]
  %v1441 = vld [vmem:[%s1 + $0x10] sm:$0xff]
  %v1442 = vld [vmem:[%s1 + $0x18] sm:$0xff]
  %v1443 = vld [vmem:[%s1 + $0x20] sm:$0xff]
  %v1444 = vld [vmem:[%s1 + $0x28] sm:$0xff]
  %v1445 = vld [vmem:[%s1 + $0x30] sm:$0xff]
  %v1446 = vld [vmem:[%s1 + $0x38] sm:$0xff]
  %v1447 = vld [vmem:[%s1 + $0x40] sm:$0xff]
  %v1448 = vld [vmem:[%s1 + $0x48] sm:$0xff]
  %v1449 = vld [vmem:[%s1 + $0x50] sm:$0xff]
  %v1450 = vld [vmem:[%s1 + $0x58] sm:$0xff]
  %v1451 = vld [vmem:[%s1 + $0x60] sm:$0xff]
  %v1452 = vld [vmem:[%s1 + $0x68] sm:$0xff]
  %v1453 = vld [vmem:[%s1 + $0x70] sm:$0xff]
  %v1454 = vld [vmem:[%s1 + $0x78] sm:$0xff]
  %1455 = vmatprep.subr.mxu0 0.0
  %1456 = vmatpush1.msra.mxu0 %v1454
  %1457 = vmatprep.subr.mxu0 0.0
  %1458 = vmatpush1.msra.mxu0 %v1453
  %1459 = vmatprep.subr.mxu0 0.0
  %1460 = vmatpush1.msra.mxu0 %v1452
  %1461 = vmatprep.subr.mxu0 0.0
  %1462 = vmatpush1.msra.mxu0 %v1451
  %1463 = vmatprep.subr.mxu0 0.0
  %1464 = vmatpush1.msra.mxu0 %v1450
  %1465 = vmatprep.subr.mxu0 0.0
  %1466 = vmatpush1.msra.mxu0 %v1449
  %1467 = vmatprep.subr.mxu0 0.0
  %1468 = vmatpush1.msra.mxu0 %v1448
  %1469 = vmatprep.subr.mxu0 0.0
  %1470 = vmatpush1.msra.mxu0 %v1447
  %1471 = vmatprep.subr.mxu0 0.0
  %1472 = vmatpush1.msra.mxu0 %v1446
  %1473 = vmatprep.subr.mxu0 0.0
  %1474 = vmatpush1.msra.mxu0 %v1445
  %1475 = vmatprep.subr.mxu0 0.0
  %1476 = vmatpush1.msra.mxu0 %v1444
  %1477 = vmatprep.subr.mxu0 0.0
  %1478 = vmatpush1.msra.mxu0 %v1443
  %1479 = vmatprep.subr.mxu0 0.0
  %1480 = vmatpush1.msra.mxu0 %v1442
  %1481 = vmatprep.subr.mxu0 0.0
  %1482 = vmatpush1.msra.mxu0 %v1441
  %1483 = vmatprep.subr.mxu0 0.0
  %1484 = vmatpush1.msra.mxu0 %v1440
  %1485 = vmatprep.subr.mxu0 0.0
  %1486 = vmatpush1.msra.mxu0 %v1439
  %1487 = vmatprep.subr.mxu0 0.0
  %1488 = vmatpush2.msra.mxu0 0.0
  %1489 = vmatprep.subr.mxu0 0.0
  %1490 = vmatpush2.msra.mxu0 0.0
  %1491 = vmatprep.subr.mxu0 0.0
  %1492 = vmatpush2.msra.mxu0 0.0
  %1493 = vmatprep.subr.mxu0 0.0
  %1494 = vmatpush2.msra.mxu0 0.0
  %1495 = vmatprep.subr.mxu0 0.0
  %1496 = vmatpush2.msra.mxu0 0.0
  %1497 = vmatprep.subr.mxu0 0.0
  %1498 = vmatpush2.msra.mxu0 0.0
  %1499 = vmatprep.subr.mxu0 0.0
  %1500 = vmatpush2.msra.mxu0 0.0
  %1501 = vmatprep.subr.mxu0 0.0
  %1502 = vmatpush2.msra.mxu0 0.0
  %1503 = vmatprep.subr.mxu0 0.0
  %1504 = vmatpush2.msra.mxu0 0.0
  %1505 = vmatprep.subr.mxu0 0.0
  %1506 = vmatpush2.msra.mxu0 0.0
  %1507 = vmatprep.subr.mxu0 0.0
  %1508 = vmatpush2.msra.mxu0 0.0
  %1509 = vmatprep.subr.mxu0 0.0
  %1510 = vmatpush2.msra.mxu0 0.0
  %1511 = vmatprep.subr.mxu0 0.0
  %1512 = vmatpush2.msra.mxu0 0.0
  %1513 = vmatprep.subr.mxu0 0.0
  %1514 = vmatpush2.msra.mxu0 0.0
  %1515 = vmatprep.subr.mxu0 0.0
  %1516 = vmatpush2.msra.mxu0 0.0
  %1517 = vmatprep.subr.mxu0 0.0
  %1518 = vmatpush2.msra.mxu0 0.0
  %1519 = vmatprep.mubr.f32.mxu0 0.0
  %1520 = vmatmul.mubr.f32.gmra.mxu0 %v1324
  %v1521 = vpop.f32.mrf.mxu0
  %v1522 = vadd.f32 0.0, %v1521
  %v1523 = vpop.f32.mrf.mxu0
  %1524 = vdwg.mxu0
  %v1525 = vadd.f32 %v1438, %v1522
  %v1526 = vtanh.pop %v1525
  %v1527 = vld [vmem:[%s2] sm:$0xff]
  %v1528 = vld [vmem:[%s2 + $0x8] sm:$0xff]
  %v1529 = vld [vmem:[%s2 + $0x10] sm:$0xff]
  %v1530 = vld [vmem:[%s2 + $0x18] sm:$0xff]
  %v1531 = vld [vmem:[%s2 + $0x20] sm:$0xff]
  %v1532 = vld [vmem:[%s2 + $0x28] sm:$0xff]
  %v1533 = vld [vmem:[%s2 + $0x30] sm:$0xff]
  %v1534 = vld [vmem:[%s2 + $0x38] sm:$0xff]
  %v1535 = vld [vmem:[%s2 + $0x40] sm:$0xff]
  %v1536 = vld [vmem:[%s2 + $0x48] sm:$0xff]
  %v1537 = vld [vmem:[%s2 + $0x50] sm:$0xff]
  %v1538 = vld [vmem:[%s2 + $0x58] sm:$0xff]
  %v1539 = vld [vmem:[%s2 + $0x60] sm:$0xff]
  %v1540 = vld [vmem:[%s2 + $0x68] sm:$0xff]
  %v1541 = vld [vmem:[%s2 + $0x70] sm:$0xff]
  %v1542 = vld [vmem:[%s2 + $0x78] sm:$0xff]
  %v1543 = vld [vmem:[%s2 + $0x80] sm:$0xff]
  %v1544 = vld [vmem:[%s2 + $0x88] sm:$0xff]
  %v1545 = vld [vmem:[%s2 + $0x90] sm:$0xff]
  %v1546 = vld [vmem:[%s2 + $0x98] sm:$0xff]
  %v1547 = vld [vmem:[%s2 + $0xa0] sm:$0xff]
  %v1548 = vld [vmem:[%s2 + $0xa8] sm:$0xff]
  %v1549 = vld [vmem:[%s2 + $0xb0] sm:$0xff]
  %v1550 = vld [vmem:[%s2 + $0xb8] sm:$0xff]
  %v1551 = vld [vmem:[%s2 + $0xc0] sm:$0xff]
  %v1552 = vld [vmem:[%s2 + $0xc8] sm:$0xff]
  %v1553 = vld [vmem:[%s2 + $0xd0] sm:$0xff]
  %v1554 = vld [vmem:[%s2 + $0xd8] sm:$0xff]
  %v1555 = vld [vmem:[%s2 + $0xe0] sm:$0xff]
  %v1556 = vld [vmem:[%s2 + $0xe8] sm:$0xff]
  %v1557 = vld [vmem:[%s2 + $0xf0] sm:$0xff]
  %v1558 = vld [vmem:[%s2 + $0xf8] sm:$0xff]
  %v1559 = vld [vmem:[%s3] sm:$0x1]
  %v1561 = vlaneseq
  %v1562 = vshrl.u32 %v1561, 7
  %v1563 = vsub.s32 0, %v1562
  %v1564 = vrot.slane %v1559, %v1563
  %1566 = vmatprep.subr.mxu0 0.0
  %1567 = vmatpush1.msra.mxu0 %v1542
  %1568 = vmatprep.subr.mxu0 0.0
  %1569 = vmatpush1.msra.mxu0 %v1541
  %1570 = vmatprep.subr.mxu0 0.0
  %1571 = vmatpush1.msra.mxu0 %v1540
  %1572 = vmatprep.subr.mxu0 0.0
  %1573 = vmatpush1.msra.mxu0 %v1539
  %1574 = vmatprep.subr.mxu0 0.0
  %1575 = vmatpush1.msra.mxu0 %v1538
  %1576 = vmatprep.subr.mxu0 0.0
  %1577 = vmatpush1.msra.mxu0 %v1537
  %1578 = vmatprep.subr.mxu0 0.0
  %1579 = vmatpush1.msra.mxu0 %v1536
  %1580 = vmatprep.subr.mxu0 0.0
  %1581 = vmatpush1.msra.mxu0 %v1535
  %1582 = vmatprep.subr.mxu0 0.0
  %1583 = vmatpush1.msra.mxu0 %v1534
  %1584 = vmatprep.subr.mxu0 0.0
  %1585 = vmatpush1.msra.mxu0 %v1533
  %1586 = vmatprep.subr.mxu0 0.0
  %1587 = vmatpush1.msra.mxu0 %v1532
  %1588 = vmatprep.subr.mxu0 0.0
  %1589 = vmatpush1.msra.mxu0 %v1531
  %1590 = vmatprep.subr.mxu0 0.0
  %1591 = vmatpush1.msra.mxu0 %v1530
  %1592 = vmatprep.subr.mxu0 0.0
  %1593 = vmatpush1.msra.mxu0 %v1529
  %1594 = vmatprep.subr.mxu0 0.0
  %1595 = vmatpush1.msra.mxu0 %v1528
  %1596 = vmatprep.subr.mxu0 0.0
  %1597 = vmatpush1.msra.mxu0 %v1527
  %1598 = vmatprep.subr.mxu0 0.0
  %1599 = vmatpush2.msra.mxu0 %v1558
  %1600 = vmatprep.subr.mxu0 0.0
  %1601 = vmatpush2.msra.mxu0 %v1557
  %1602 = vmatprep.subr.mxu0 0.0
  %1603 = vmatpush2.msra.mxu0 %v1556
  %1604 = vmatprep.subr.mxu0 0.0
  %1605 = vmatpush2.msra.mxu0 %v1555
  %1606 = vmatprep.subr.mxu0 0.0
  %1607 = vmatpush2.msra.mxu0 %v1554
  %1608 = vmatprep.subr.mxu0 0.0
  %1609 = vmatpush2.msra.mxu0 %v1553
  %1610 = vmatprep.subr.mxu0 0.0
  %1611 = vmatpush2.msra.mxu0 %v1552
  %1612 = vmatprep.subr.mxu0 0.0
  %1613 = vmatpush2.msra.mxu0 %v1551
  %1614 = vmatprep.subr.mxu0 0.0
  %1615 = vmatpush2.msra.mxu0 %v1550
  %1616 = vmatprep.subr.mxu0 0.0
  %1617 = vmatpush2.msra.mxu0 %v1549
  %1618 = vmatprep.subr.mxu0 0.0
  %1619 = vmatpush2.msra.mxu0 %v1548
  %1620 = vmatprep.subr.mxu0 0.0
  %1621 = vmatpush2.msra.mxu0 %v1547
  %1622 = vmatprep.subr.mxu0 0.0
  %1623 = vmatpush2.msra.mxu0 %v1546
  %1624 = vmatprep.subr.mxu0 0.0
  %1625 = vmatpush2.msra.mxu0 %v1545
  %1626 = vmatprep.subr.mxu0 0.0
  %1627 = vmatpush2.msra.mxu0 %v1544
  %1628 = vmatprep.subr.mxu0 0.0
  %1629 = vmatpush2.msra.mxu0 %v1543
  %1630 = vmatprep.mubr.f32.mxu0 %v1434
  %1631 = vmatmul.mubr.f32.gmra.mxu0 %v1526
  %v1632 = vpop.f32.mrf.mxu0
  %v1633 = vadd.f32 %v1564, %v1632
  %v1634 = vpop.f32.mrf.mxu0
  %1635 = vdwg.mxu0
  %v1636 = vtanh.pop %v1633
  %s1637 = scalar_lea.vmem %s4, 56
  %1638 = vst [vmem:[%s1637] sm:$0xff] %v1636
  %1639 = vst [vmem:[#allocation2] sm:$0xff] %v1526
  %1640 = vst [vmem:[#allocation3] sm:$0xff] %v1636
  // Predicated region
  $region22: #{rnn_lm_forward.4} parent=0 // pred_check
    _
  $region23: #{rnn_lm_forward.4} parent=0 // pred_check_branch
    %1642 = sbr.rel (0) target = $region25
  $region24: #{rnn_lm_forward.4} parent=0 // pred_region
    _
  $region25: #{rnn_lm_forward.4} parent=0 // pred_fallthru
    _
  // Predicated region
  $region26: #{rnn_lm_forward.4} parent=0 // pred_check
    _
  $region27: #{rnn_lm_forward.4} parent=0 // pred_check_branch
    %1644 = sbr.rel (0) target = $region29
  $region28: #{rnn_lm_forward.4} parent=0 // pred_region
    _
  $region29: #{rnn_lm_forward.4} parent=0 // pred_fallthru
    _

</llo_original>
